<compile_context>
chip_gen: v6e
topology: v6e:2x2x1
jax: 0.10.0
libtpu: 0.0.40
codegen_flags: <defaults>
</compile_context>

<pallas_src>
import functools
import math

import jax
import jax.numpy as jnp
from jax import lax
from jax.experimental import pallas as pl
from jax.experimental.pallas import tpu as pltpu


def _layer_norm(x, gamma, beta, eps=1e-6):
    mu = jnp.mean(x, axis=-1, keepdims=True)
    var = jnp.mean(jnp.square(x - mu), axis=-1, keepdims=True)
    return (x - mu) * lax.rsqrt(var + eps) * gamma + beta


def _encoder_layer_kernel(n_head, d_k, d_v,
                          xfull_ref, xq_ref,
                          wq_ref, bq_ref, wk_ref, bk_ref, wv_ref, bv_ref,
                          wo_ref, bo_ref, g1_ref, be1_ref,
                          w1_ref, b1_ref, w2_ref, b2_ref, g2_ref, be2_ref,
                          out_ref, attn_ref,
                          k_scr, v_scr, o_scr):
    qt = pl.program_id(1)
    bf16 = jnp.bfloat16

    # ---- K/V projection: once per batch element (first q-tile), kept in VMEM ----
    @pl.when(qt == 0)
    def _():
        xf = xfull_ref[0].astype(bf16)                                        # (S, D)
        k = jnp.dot(xf, wk_ref[...], preferred_element_type=jnp.float32) + bk_ref[...]
        v = jnp.dot(xf, wv_ref[...], preferred_element_type=jnp.float32) + bv_ref[...]
        k_scr[...] = k.astype(bf16)                                           # (S, H*dk)
        v_scr[...] = v.astype(bf16)                                           # (S, H*dv)

    residual = xq_ref[0]                                                      # (TQ, D) f32
    xq = residual.astype(bf16)

    # ---- Q projection; bias added once, 1/sqrt(d_k) folded into q once ----------
    q = jnp.dot(xq, wq_ref[...], preferred_element_type=jnp.float32) + bq_ref[...]
    q = (q * (1.0 / math.sqrt(d_k))).astype(bf16)                             # (TQ, H*dk)

    # ---- per-head attention (dot_general, no explicit transpose) ----------------
    for h in range(n_head):                                                   # static unroll
        qh = q[:, h * d_k:(h + 1) * d_k]                                      # (TQ, dk) bf16
        kh = k_scr[:, h * d_k:(h + 1) * d_k]                                  # (S,  dk) bf16
        s = lax.dot_general(qh, kh, (((1,), (1,)), ((), ())),
                            preferred_element_type=jnp.float32)               # (TQ, S) f32
        s = s - jnp.max(s, axis=-1, keepdims=True)
        p = jnp.exp(s)
        inv = pl.reciprocal(jnp.sum(p, axis=-1, keepdims=True), approx=True)
        p = p * inv                                                           # softmax
        attn_ref[0, h, :, :] = p.astype(attn_ref.dtype)                       # bf16 store
        vh = v_scr[:, h * d_v:(h + 1) * d_v]                                  # (S, dv) bf16
        pv = jnp.dot(p.astype(bf16), vh, preferred_element_type=jnp.float32)  # (TQ, dv)
        o_scr[:, h * d_v:(h + 1) * d_v] = pv.astype(bf16)

    # ---- output projection + residual + LayerNorm --------------------------------
    o = jnp.dot(o_scr[...], wo_ref[...], preferred_element_type=jnp.float32) + bo_ref[...]
    o = _layer_norm(o + residual, g1_ref[...], be1_ref[...])

    # ---- position-wise FFN + residual + LayerNorm ---------------------------------
    h1 = jnp.dot(o.astype(bf16), w1_ref[...],
                 preferred_element_type=jnp.float32) + b1_ref[...]
    h1 = jnp.maximum(h1, 0.0)
    h2 = jnp.dot(h1.astype(bf16), w2_ref[...],
                 preferred_element_type=jnp.float32) + b2_ref[...]
    y = _layer_norm(h2 + o, g2_ref[...], be2_ref[...])

    out_ref[0] = y.astype(out_ref.dtype)


_WEIGHT_ORDER = ["wq", "bq", "wk", "bk", "wv", "bv", "wo", "bo",
                 "ln1_g", "ln1_b", "w1", "b1", "w2", "b2", "ln2_g", "ln2_b"]


def encoder_layer(x, params, *, n_head, d_k, d_v, q_tile=None):
    """x: (B, S, D) float32. Returns (enc_output (B,S,D) f32, attn (B,H,S,S) bf16)."""
    B, S, D = x.shape
    TQ = S if q_tile is None else min(q_tile, S)
    assert S % TQ == 0 and (TQ == S or TQ % 8 == 0), "q_tile must divide S (mult of 8)"
    n_qt = S // TQ

    kernel = functools.partial(_encoder_layer_kernel, n_head, d_k, d_v)

    def const_spec(shape):
        nd = len(shape)
        return pl.BlockSpec(shape, lambda b, qt, _nd=nd: (0,) * _nd)

    in_specs = [
        pl.BlockSpec((1, S, D), lambda b, qt: (b, 0, 0)),    # full sequence (K/V source)
        pl.BlockSpec((1, TQ, D), lambda b, qt: (b, qt, 0)),  # query tile (+ residual)
    ]
    args = [x, x]
    for name in _WEIGHT_ORDER:
        p = params[name]
        args.append(p)
        in_specs.append(const_spec(p.shape))

    out_shape = (jax.ShapeDtypeStruct((B, S, D), x.dtype),
                 jax.ShapeDtypeStruct((B, n_head, S, S), jnp.bfloat16))
    out_specs = (pl.BlockSpec((1, TQ, D), lambda b, qt: (b, qt, 0)),
                 pl.BlockSpec((1, n_head, TQ, S), lambda b, qt: (b, 0, qt, 0)))

    return pl.pallas_call(
        kernel,
        grid=(B, n_qt),
        in_specs=in_specs,
        out_specs=out_specs,
        out_shape=out_shape,
        scratch_shapes=[
            pltpu.VMEM((S, n_head * d_k), jnp.bfloat16),   # K (per-batch, persistent)
            pltpu.VMEM((S, n_head * d_v), jnp.bfloat16),   # V (per-batch, persistent)
            pltpu.VMEM((TQ, n_head * d_v), jnp.bfloat16),  # concatenated head outputs
        ],
        compiler_params=pltpu.CompilerParams(
            dimension_semantics=("parallel", "arbitrary"),
            vmem_limit_bytes=48 * 1024 * 1024,
        ),
    )(*args)


def init_params(key, d_model, d_inner, n_head, d_k, d_v):
    ks = jax.random.split(key, 12)

    def w(k, shape, fan_in, dtype=jnp.bfloat16):
        return (jax.random.normal(k, shape, jnp.float32) * (1.0 / math.sqrt(fan_in))
                ).astype(dtype)

    f32 = jnp.float32
    return {
        # attention projections (stored as (in, out)); matmul weights kept in bf16
        "wq": w(ks[0], (d_model, n_head * d_k), d_model),
        "bq": w(ks[1], (1, n_head * d_k), d_model, f32),
        "wk": w(ks[2], (d_model, n_head * d_k), d_model),
        "bk": w(ks[3], (1, n_head * d_k), d_model, f32),
        "wv": w(ks[4], (d_model, n_head * d_v), d_model),
        "bv": w(ks[5], (1, n_head * d_v), d_model, f32),
        "wo": w(ks[6], (n_head * d_v, d_model), n_head * d_v),
        "bo": w(ks[7], (1, d_model), n_head * d_v, f32),
        # layer norm 1 (nn.LayerNorm init: gamma=1, beta=0)
        "ln1_g": jnp.ones((1, d_model), f32),
        "ln1_b": jnp.zeros((1, d_model), f32),
        # position-wise FFN (Conv1d kernel-size-1 == Linear)
        "w1": w(ks[8], (d_model, d_inner), d_model),
        "b1": w(ks[9], (1, d_inner), d_model, f32),
        "w2": w(ks[10], (d_inner, d_model), d_inner),
        "b2": w(ks[11], (1, d_model), d_inner, f32),
        # layer norm 2
        "ln2_g": jnp.ones((1, d_model), f32),
        "ln2_b": jnp.zeros((1, d_model), f32),
    }


def encoder_layer_ref(x, params, *, n_head, d_k, d_v):
    """Pure-JAX reference mirroring the kernel's bf16 cast points."""
    f32, bf16 = jnp.float32, jnp.bfloat16
    B, S, D = x.shape

    def q8(a):  # quantize to bf16 and back (mirrors in-kernel casts to the MXU)
        return a.astype(bf16).astype(f32)

    w = {kk: vv.astype(f32) for kk, vv in params.items()}
    xq = q8(x.astype(f32))
    q = xq @ w["wq"] + w["bq"]
    k = q8(xq @ w["wk"] + w["bk"])
    v = q8(xq @ w["wv"] + w["bv"])
    q = q8(q * (1.0 / math.sqrt(d_k)))
    qh = q.reshape(B, S, n_head, d_k).transpose(0, 2, 1, 3)
    kh = k.reshape(B, S, n_head, d_k).transpose(0, 2, 1, 3)
    vh = v.reshape(B, S, n_head, d_v).transpose(0, 2, 1, 3)
    s = jnp.einsum("bhqd,bhkd->bhqk", qh, kh)
    p = jax.nn.softmax(s, axis=-1)
    o = jnp.einsum("bhqk,bhkd->bhqd", q8(p), vh)
    o = q8(o.transpose(0, 2, 1, 3).reshape(B, S, n_head * d_v))
    o = o @ w["wo"] + w["bo"]
    o = _layer_norm(o + x, w["ln1_g"], w["ln1_b"])
    h1 = jax.nn.relu(q8(o) @ w["w1"] + w["b1"])
    h2 = q8(h1) @ w["w2"] + w["b2"]
    y = _layer_norm(h2 + o, w["ln2_g"], w["ln2_b"])
    return y, p


if __name__ == "__main__":
    B, S = 2, 16
    d_model, d_inner, n_head, d_k, d_v = 32, 64, 4, 8, 8

    key = jax.random.PRNGKey(0)
    k_x, k_p = jax.random.split(key)
    x = jax.random.normal(k_x, (B, S, d_model), jnp.float32)
    params = init_params(k_p, d_model, d_inner, n_head, d_k, d_v)

    # q_tile=8 exercises the (batch, query-tile) grid: grid = (2, 2).
    enc_out, attn = encoder_layer(x, params, n_head=n_head, d_k=d_k, d_v=d_v, q_tile=8)
    jax.block_until_ready((enc_out, attn))

    ref_out, ref_attn = encoder_layer_ref(x, params, n_head=n_head, d_k=d_k, d_v=d_v)
    assert enc_out.shape == (B, S, d_model)
    assert attn.shape == (B, n_head, S, S)
    assert jnp.max(jnp.abs(enc_out - ref_out)) < 2e-2
    assert jnp.max(jnp.abs(attn.astype(jnp.float32) - ref_attn)) < 2e-2

    print("KERNEL_OK")
</pallas_src>

<mosaic_0001>
module attributes {stable_mosaic.version = 11 : i64} {
  func.func @_encoder_layer_kernel(%arg0: i32, %arg1: i32, %arg2: memref<1x16x32xf32, #tpu.memory_space<vmem>>, %arg3: memref<1x8x32xf32, #tpu.memory_space<vmem>>, %arg4: memref<32x32xbf16, #tpu.memory_space<vmem>>, %arg5: memref<1x32xf32, #tpu.memory_space<vmem>>, %arg6: memref<32x32xbf16, #tpu.memory_space<vmem>>, %arg7: memref<1x32xf32, #tpu.memory_space<vmem>>, %arg8: memref<32x32xbf16, #tpu.memory_space<vmem>>, %arg9: memref<1x32xf32, #tpu.memory_space<vmem>>, %arg10: memref<32x32xbf16, #tpu.memory_space<vmem>>, %arg11: memref<1x32xf32, #tpu.memory_space<vmem>>, %arg12: memref<1x32xf32, #tpu.memory_space<vmem>>, %arg13: memref<1x32xf32, #tpu.memory_space<vmem>>, %arg14: memref<32x64xbf16, #tpu.memory_space<vmem>>, %arg15: memref<1x64xf32, #tpu.memory_space<vmem>>, %arg16: memref<64x32xbf16, #tpu.memory_space<vmem>>, %arg17: memref<1x32xf32, #tpu.memory_space<vmem>>, %arg18: memref<1x32xf32, #tpu.memory_space<vmem>>, %arg19: memref<1x32xf32, #tpu.memory_space<vmem>>, %arg20: memref<1x8x32xf32, #tpu.memory_space<vmem>>, %arg21: memref<1x4x8x16xbf16, #tpu.memory_space<vmem>>, %arg22: memref<16x32xbf16, #tpu.memory_space<vmem>>, %arg23: memref<16x32xbf16, #tpu.memory_space<vmem>>, %arg24: memref<8x32xbf16, #tpu.memory_space<vmem>>) attributes {dimension_semantics = [#tpu.dimension_semantics<parallel>, #tpu.dimension_semantics<arbitrary>], iteration_bounds = array<i64: 2, 2>, scalar_prefetch = 0 : i64, scratch_operands = 3 : i64, tpu.core_type = #tpu.core_type<tc>, window_params = [{transform_indices = @transform_0, window_bounds = array<i64: 1, 16, 32>}, {transform_indices = @transform_1, window_bounds = array<i64: 1, 8, 32>}, {pipeline_mode = #tpu.pipeline_mode<synchronous>, transform_indices = @transform_2, window_bounds = array<i64: 32, 32>}, {pipeline_mode = #tpu.pipeline_mode<synchronous>, transform_indices = @transform_3, window_bounds = array<i64: 1, 32>}, {pipeline_mode = #tpu.pipeline_mode<synchronous>, transform_indices = @transform_4, window_bounds = array<i64: 32, 32>}, {pipeline_mode = #tpu.pipeline_mode<synchronous>, transform_indices = @transform_5, window_bounds = array<i64: 1, 32>}, {pipeline_mode = #tpu.pipeline_mode<synchronous>, transform_indices = @transform_6, window_bounds = array<i64: 32, 32>}, {pipeline_mode = #tpu.pipeline_mode<synchronous>, transform_indices = @transform_7, window_bounds = array<i64: 1, 32>}, {pipeline_mode = #tpu.pipeline_mode<synchronous>, transform_indices = @transform_8, window_bounds = array<i64: 32, 32>}, {pipeline_mode = #tpu.pipeline_mode<synchronous>, transform_indices = @transform_9, window_bounds = array<i64: 1, 32>}, {pipeline_mode = #tpu.pipeline_mode<synchronous>, transform_indices = @transform_10, window_bounds = array<i64: 1, 32>}, {pipeline_mode = #tpu.pipeline_mode<synchronous>, transform_indices = @transform_11, window_bounds = array<i64: 1, 32>}, {pipeline_mode = #tpu.pipeline_mode<synchronous>, transform_indices = @transform_12, window_bounds = array<i64: 32, 64>}, {pipeline_mode = #tpu.pipeline_mode<synchronous>, transform_indices = @transform_13, window_bounds = array<i64: 1, 64>}, {pipeline_mode = #tpu.pipeline_mode<synchronous>, transform_indices = @transform_14, window_bounds = array<i64: 64, 32>}, {pipeline_mode = #tpu.pipeline_mode<synchronous>, transform_indices = @transform_15, window_bounds = array<i64: 1, 32>}, {pipeline_mode = #tpu.pipeline_mode<synchronous>, transform_indices = @transform_16, window_bounds = array<i64: 1, 32>}, {pipeline_mode = #tpu.pipeline_mode<synchronous>, transform_indices = @transform_17, window_bounds = array<i64: 1, 32>}, {transform_indices = @transform_18, window_bounds = array<i64: 1, 8, 32>}, {transform_indices = @transform_19, window_bounds = array<i64: 1, 4, 8, 16>}]} {
    %c0_i32 = arith.constant 0 : i32
    %0 = arith.cmpi eq, %arg1, %c0_i32 : i32
    %1 = arith.extui %0 : i1 to i32
    %c0_i32_0 = arith.constant 0 : i32
    %2 = arith.cmpi ne, %1, %c0_i32_0 : i32
    scf.if %2 {
      %c0_97 = arith.constant 0 : index
      %c0_98 = arith.constant 0 : index
      %c0_99 = arith.constant 0 : index
      %175 = vector.load %arg2[%c0_97, %c0_98, %c0_99] : memref<1x16x32xf32, #tpu.memory_space<vmem>>, vector<1x16x32xf32>
      %176 = vector.shape_cast %175 : vector<1x16x32xf32> to vector<16x32xf32>
      %177 = arith.truncf %176 : vector<16x32xf32> to vector<16x32xbf16>
      %c0_100 = arith.constant 0 : index
      %c0_101 = arith.constant 0 : index
      %178 = vector.load %arg6[%c0_100, %c0_101] : memref<32x32xbf16, #tpu.memory_space<vmem>>, vector<32x32xbf16>
      %cst_102 = arith.constant dense<0.000000e+00> : vector<16x32xf32>
      %179 = tpu.matmul %177, %178, %cst_102 {dimension_numbers = #tpu.dot_dimension_numbers<[1], [0], [0], [1], [0, 0, 1, 1], [], []>} : vector<16x32xbf16>, vector<32x32xbf16>, vector<16x32xf32> -> vector<16x32xf32>
      %c0_103 = arith.constant 0 : index
      %c0_104 = arith.constant 0 : index
      %180 = vector.load %arg7[%c0_103, %c0_104] : memref<1x32xf32, #tpu.memory_space<vmem>>, vector<1x32xf32>
      %181 = vector.broadcast %180 : vector<1x32xf32> to vector<16x32xf32>
      %182 = arith.addf %179, %181 : vector<16x32xf32>
      %c0_105 = arith.constant 0 : index
      %c0_106 = arith.constant 0 : index
      %183 = vector.load %arg8[%c0_105, %c0_106] : memref<32x32xbf16, #tpu.memory_space<vmem>>, vector<32x32xbf16>
      %cst_107 = arith.constant dense<0.000000e+00> : vector<16x32xf32>
      %184 = tpu.matmul %177, %183, %cst_107 {dimension_numbers = #tpu.dot_dimension_numbers<[1], [0], [0], [1], [0, 0, 1, 1], [], []>} : vector<16x32xbf16>, vector<32x32xbf16>, vector<16x32xf32> -> vector<16x32xf32>
      %c0_108 = arith.constant 0 : index
      %c0_109 = arith.constant 0 : index
      %185 = vector.load %arg9[%c0_108, %c0_109] : memref<1x32xf32, #tpu.memory_space<vmem>>, vector<1x32xf32>
      %186 = vector.broadcast %185 : vector<1x32xf32> to vector<16x32xf32>
      %187 = arith.addf %184, %186 : vector<16x32xf32>
      %188 = arith.truncf %182 : vector<16x32xf32> to vector<16x32xbf16>
      %c0_110 = arith.constant 0 : index
      %c0_111 = arith.constant 0 : index
      %189 = vector.load %arg22[%c0_110, %c0_111] : memref<16x32xbf16, #tpu.memory_space<vmem>>, vector<16x32xbf16>
      tpu.vector_store %arg22[%c0_110, %c0_111], %188 {strides = array<i32>} : memref<16x32xbf16, #tpu.memory_space<vmem>>, vector<16x32xbf16>,
      %190 = arith.truncf %187 : vector<16x32xf32> to vector<16x32xbf16>
      %c0_112 = arith.constant 0 : index
      %c0_113 = arith.constant 0 : index
      %191 = vector.load %arg23[%c0_112, %c0_113] : memref<16x32xbf16, #tpu.memory_space<vmem>>, vector<16x32xbf16>
      tpu.vector_store %arg23[%c0_112, %c0_113], %190 {strides = array<i32>} : memref<16x32xbf16, #tpu.memory_space<vmem>>, vector<16x32xbf16>,
    } else {
    }
    %c0 = arith.constant 0 : index
    %c0_1 = arith.constant 0 : index
    %c0_2 = arith.constant 0 : index
    %3 = vector.load %arg3[%c0, %c0_1, %c0_2] : memref<1x8x32xf32, #tpu.memory_space<vmem>>, vector<1x8x32xf32>
    %4 = vector.shape_cast %3 : vector<1x8x32xf32> to vector<8x32xf32>
    %5 = arith.truncf %4 : vector<8x32xf32> to vector<8x32xbf16>
    %c0_3 = arith.constant 0 : index
    %c0_4 = arith.constant 0 : index
    %6 = vector.load %arg4[%c0_3, %c0_4] : memref<32x32xbf16, #tpu.memory_space<vmem>>, vector<32x32xbf16>
    %cst = arith.constant dense<0.000000e+00> : vector<8x32xf32>
    %7 = tpu.matmul %5, %6, %cst {dimension_numbers = #tpu.dot_dimension_numbers<[1], [0], [0], [1], [0, 0, 1, 1], [], []>} : vector<8x32xbf16>, vector<32x32xbf16>, vector<8x32xf32> -> vector<8x32xf32>
    %c0_5 = arith.constant 0 : index
    %c0_6 = arith.constant 0 : index
    %8 = vector.load %arg5[%c0_5, %c0_6] : memref<1x32xf32, #tpu.memory_space<vmem>>, vector<1x32xf32>
    %9 = vector.broadcast %8 : vector<1x32xf32> to vector<8x32xf32>
    %10 = arith.addf %7, %9 : vector<8x32xf32>
    %cst_7 = arith.constant 0.353553385 : f32
    %11 = vector.broadcast %cst_7 : f32 to vector<8x32xf32>
    %12 = arith.mulf %10, %11 : vector<8x32xf32>
    %13 = arith.truncf %12 : vector<8x32xf32> to vector<8x32xbf16>
    %14 = vector.extract_strided_slice %13 {offsets = [0, 0], sizes = [8, 8], strides = [1, 1]} : vector<8x32xbf16> to vector<8x8xbf16>
    %c0_8 = arith.constant 0 : index
    %c0_9 = arith.constant 0 : index
    %15 = vector.load %arg22[%c0_8, %c0_9] : memref<16x32xbf16, #tpu.memory_space<vmem>>, vector<16x8xbf16>
    %cst_10 = arith.constant dense<0.000000e+00> : vector<8x16xf32>
    %16 = tpu.matmul %14, %15, %cst_10 {dimension_numbers = #tpu.dot_dimension_numbers<[1], [1], [0], [0], [0, 0, 1, 0], [], []>} : vector<8x8xbf16>, vector<16x8xbf16>, vector<8x16xf32> -> vector<8x16xf32>
    %cst_11 = arith.constant dense<0xFF800000> : vector<8xf32>
    %17 = vector.multi_reduction <maximumf>, %16, %cst_11 [1] : vector<8x16xf32> to vector<8xf32>
    %18 = vector.shape_cast %17 : vector<8xf32> to vector<8x1xf32>
    %19 = vector.broadcast %18 : vector<8x1xf32> to vector<8x16xf32>
    %20 = arith.subf %16, %19 : vector<8x16xf32>
    %21 = math.exp %20 : vector<8x16xf32>
    %cst_12 = arith.constant dense<0.000000e+00> : vector<8xf32>
    %22 = vector.multi_reduction <add>, %21, %cst_12 [1] : vector<8x16xf32> to vector<8xf32>
    %23 = vector.shape_cast %22 : vector<8xf32> to vector<8x1xf32>
    %24 = tpu.reciprocal %23 {approx = true} : vector<8x1xf32> -> vector<8x1xf32>
    %25 = vector.broadcast %24 : vector<8x1xf32> to vector<8x16xf32>
    %26 = arith.mulf %21, %25 : vector<8x16xf32>
    %27 = arith.truncf %26 : vector<8x16xf32> to vector<8x16xbf16>
    %c0_13 = arith.constant 0 : index
    %c0_14 = arith.constant 0 : index
    %c0_15 = arith.constant 0 : index
    %c0_16 = arith.constant 0 : index
    %28 = vector.load %arg21[%c0_13, %c0_14, %c0_15, %c0_16] : memref<1x4x8x16xbf16, #tpu.memory_space<vmem>>, vector<1x1x8x16xbf16>
    %29 = vector.shape_cast %28 : vector<1x1x8x16xbf16> to vector<8x16xbf16>
    %30 = vector.shape_cast %27 : vector<8x16xbf16> to vector<1x1x8x16xbf16>
    tpu.vector_store %arg21[%c0_13, %c0_14, %c0_15, %c0_16], %30 {strides = array<i32>} : memref<1x4x8x16xbf16, #tpu.memory_space<vmem>>, vector<1x1x8x16xbf16>,
    %c0_17 = arith.constant 0 : index
    %c0_18 = arith.constant 0 : index
    %31 = vector.load %arg23[%c0_17, %c0_18] : memref<16x32xbf16, #tpu.memory_space<vmem>>, vector<16x8xbf16>
    %32 = arith.truncf %26 : vector<8x16xf32> to vector<8x16xbf16>
    %cst_19 = arith.constant dense<0.000000e+00> : vector<8x8xf32>
    %33 = tpu.matmul %32, %31, %cst_19 {dimension_numbers = #tpu.dot_dimension_numbers<[1], [0], [0], [1], [0, 0, 1, 1], [], []>} : vector<8x16xbf16>, vector<16x8xbf16>, vector<8x8xf32> -> vector<8x8xf32>
    %34 = arith.truncf %33 : vector<8x8xf32> to vector<8x8xbf16>
    %c0_20 = arith.constant 0 : index
    %c0_21 = arith.constant 0 : index
    %35 = vector.load %arg24[%c0_20, %c0_21] : memref<8x32xbf16, #tpu.memory_space<vmem>>, vector<8x8xbf16>
    tpu.vector_store %arg24[%c0_20, %c0_21], %34 {strides = array<i32>} : memref<8x32xbf16, #tpu.memory_space<vmem>>, vector<8x8xbf16>,
    %36 = vector.extract_strided_slice %13 {offsets = [0, 8], sizes = [8, 8], strides = [1, 1]} : vector<8x32xbf16> to vector<8x8xbf16>
    %c0_22 = arith.constant 0 : index
    %c8 = arith.constant 8 : index
    %37 = vector.load %arg22[%c0_22, %c8] : memref<16x32xbf16, #tpu.memory_space<vmem>>, vector<16x8xbf16>
    %cst_23 = arith.constant dense<0.000000e+00> : vector<8x16xf32>
    %38 = tpu.matmul %36, %37, %cst_23 {dimension_numbers = #tpu.dot_dimension_numbers<[1], [1], [0], [0], [0, 0, 1, 0], [], []>} : vector<8x8xbf16>, vector<16x8xbf16>, vector<8x16xf32> -> vector<8x16xf32>
    %cst_24 = arith.constant dense<0xFF800000> : vector<8xf32>
    %39 = vector.multi_reduction <maximumf>, %38, %cst_24 [1] : vector<8x16xf32> to vector<8xf32>
    %40 = vector.shape_cast %39 : vector<8xf32> to vector<8x1xf32>
    %41 = vector.broadcast %40 : vector<8x1xf32> to vector<8x16xf32>
    %42 = arith.subf %38, %41 : vector<8x16xf32>
    %43 = math.exp %42 : vector<8x16xf32>
    %cst_25 = arith.constant dense<0.000000e+00> : vector<8xf32>
    %44 = vector.multi_reduction <add>, %43, %cst_25 [1] : vector<8x16xf32> to vector<8xf32>
    %45 = vector.shape_cast %44 : vector<8xf32> to vector<8x1xf32>
    %46 = tpu.reciprocal %45 {approx = true} : vector<8x1xf32> -> vector<8x1xf32>
    %47 = vector.broadcast %46 : vector<8x1xf32> to vector<8x16xf32>
    %48 = arith.mulf %43, %47 : vector<8x16xf32>
    %49 = arith.truncf %48 : vector<8x16xf32> to vector<8x16xbf16>
    %c0_26 = arith.constant 0 : index
    %c1 = arith.constant 1 : index
    %c0_27 = arith.constant 0 : index
    %c0_28 = arith.constant 0 : index
    %50 = vector.load %arg21[%c0_26, %c1, %c0_27, %c0_28] : memref<1x4x8x16xbf16, #tpu.memory_space<vmem>>, vector<1x1x8x16xbf16>
    %51 = vector.shape_cast %50 : vector<1x1x8x16xbf16> to vector<8x16xbf16>
    %52 = vector.shape_cast %49 : vector<8x16xbf16> to vector<1x1x8x16xbf16>
    tpu.vector_store %arg21[%c0_26, %c1, %c0_27, %c0_28], %52 {strides = array<i32>} : memref<1x4x8x16xbf16, #tpu.memory_space<vmem>>, vector<1x1x8x16xbf16>,
    %c0_29 = arith.constant 0 : index
    %c8_30 = arith.constant 8 : index
    %53 = vector.load %arg23[%c0_29, %c8_30] : memref<16x32xbf16, #tpu.memory_space<vmem>>, vector<16x8xbf16>
    %54 = arith.truncf %48 : vector<8x16xf32> to vector<8x16xbf16>
    %cst_31 = arith.constant dense<0.000000e+00> : vector<8x8xf32>
    %55 = tpu.matmul %54, %53, %cst_31 {dimension_numbers = #tpu.dot_dimension_numbers<[1], [0], [0], [1], [0, 0, 1, 1], [], []>} : vector<8x16xbf16>, vector<16x8xbf16>, vector<8x8xf32> -> vector<8x8xf32>
    %56 = arith.truncf %55 : vector<8x8xf32> to vector<8x8xbf16>
    %c0_32 = arith.constant 0 : index
    %c8_33 = arith.constant 8 : index
    %57 = vector.load %arg24[%c0_32, %c8_33] : memref<8x32xbf16, #tpu.memory_space<vmem>>, vector<8x8xbf16>
    tpu.vector_store %arg24[%c0_32, %c8_33], %56 {strides = array<i32>} : memref<8x32xbf16, #tpu.memory_space<vmem>>, vector<8x8xbf16>,
    %58 = vector.extract_strided_slice %13 {offsets = [0, 16], sizes = [8, 8], strides = [1, 1]} : vector<8x32xbf16> to vector<8x8xbf16>
    %c0_34 = arith.constant 0 : index
    %c16 = arith.constant 16 : index
    %59 = vector.load %arg22[%c0_34, %c16] : memref<16x32xbf16, #tpu.memory_space<vmem>>, vector<16x8xbf16>
    %cst_35 = arith.constant dense<0.000000e+00> : vector<8x16xf32>
    %60 = tpu.matmul %58, %59, %cst_35 {dimension_numbers = #tpu.dot_dimension_numbers<[1], [1], [0], [0], [0, 0, 1, 0], [], []>} : vector<8x8xbf16>, vector<16x8xbf16>, vector<8x16xf32> -> vector<8x16xf32>
    %cst_36 = arith.constant dense<0xFF800000> : vector<8xf32>
    %61 = vector.multi_reduction <maximumf>, %60, %cst_36 [1] : vector<8x16xf32> to vector<8xf32>
    %62 = vector.shape_cast %61 : vector<8xf32> to vector<8x1xf32>
    %63 = vector.broadcast %62 : vector<8x1xf32> to vector<8x16xf32>
    %64 = arith.subf %60, %63 : vector<8x16xf32>
    %65 = math.exp %64 : vector<8x16xf32>
    %cst_37 = arith.constant dense<0.000000e+00> : vector<8xf32>
    %66 = vector.multi_reduction <add>, %65, %cst_37 [1] : vector<8x16xf32> to vector<8xf32>
    %67 = vector.shape_cast %66 : vector<8xf32> to vector<8x1xf32>
    %68 = tpu.reciprocal %67 {approx = true} : vector<8x1xf32> -> vector<8x1xf32>
    %69 = vector.broadcast %68 : vector<8x1xf32> to vector<8x16xf32>
    %70 = arith.mulf %65, %69 : vector<8x16xf32>
    %71 = arith.truncf %70 : vector<8x16xf32> to vector<8x16xbf16>
    %c0_38 = arith.constant 0 : index
    %c2 = arith.constant 2 : index
    %c0_39 = arith.constant 0 : index
    %c0_40 = arith.constant 0 : index
    %72 = vector.load %arg21[%c0_38, %c2, %c0_39, %c0_40] : memref<1x4x8x16xbf16, #tpu.memory_space<vmem>>, vector<1x1x8x16xbf16>
    %73 = vector.shape_cast %72 : vector<1x1x8x16xbf16> to vector<8x16xbf16>
    %74 = vector.shape_cast %71 : vector<8x16xbf16> to vector<1x1x8x16xbf16>
    tpu.vector_store %arg21[%c0_38, %c2, %c0_39, %c0_40], %74 {strides = array<i32>} : memref<1x4x8x16xbf16, #tpu.memory_space<vmem>>, vector<1x1x8x16xbf16>,
    %c0_41 = arith.constant 0 : index
    %c16_42 = arith.constant 16 : index
    %75 = vector.load %arg23[%c0_41, %c16_42] : memref<16x32xbf16, #tpu.memory_space<vmem>>, vector<16x8xbf16>
    %76 = arith.truncf %70 : vector<8x16xf32> to vector<8x16xbf16>
    %cst_43 = arith.constant dense<0.000000e+00> : vector<8x8xf32>
    %77 = tpu.matmul %76, %75, %cst_43 {dimension_numbers = #tpu.dot_dimension_numbers<[1], [0], [0], [1], [0, 0, 1, 1], [], []>} : vector<8x16xbf16>, vector<16x8xbf16>, vector<8x8xf32> -> vector<8x8xf32>
    %78 = arith.truncf %77 : vector<8x8xf32> to vector<8x8xbf16>
    %c0_44 = arith.constant 0 : index
    %c16_45 = arith.constant 16 : index
    %79 = vector.load %arg24[%c0_44, %c16_45] : memref<8x32xbf16, #tpu.memory_space<vmem>>, vector<8x8xbf16>
    tpu.vector_store %arg24[%c0_44, %c16_45], %78 {strides = array<i32>} : memref<8x32xbf16, #tpu.memory_space<vmem>>, vector<8x8xbf16>,
    %80 = vector.extract_strided_slice %13 {offsets = [0, 24], sizes = [8, 8], strides = [1, 1]} : vector<8x32xbf16> to vector<8x8xbf16>
    %c0_46 = arith.constant 0 : index
    %c24 = arith.constant 24 : index
    %81 = vector.load %arg22[%c0_46, %c24] : memref<16x32xbf16, #tpu.memory_space<vmem>>, vector<16x8xbf16>
    %cst_47 = arith.constant dense<0.000000e+00> : vector<8x16xf32>
    %82 = tpu.matmul %80, %81, %cst_47 {dimension_numbers = #tpu.dot_dimension_numbers<[1], [1], [0], [0], [0, 0, 1, 0], [], []>} : vector<8x8xbf16>, vector<16x8xbf16>, vector<8x16xf32> -> vector<8x16xf32>
    %cst_48 = arith.constant dense<0xFF800000> : vector<8xf32>
    %83 = vector.multi_reduction <maximumf>, %82, %cst_48 [1] : vector<8x16xf32> to vector<8xf32>
    %84 = vector.shape_cast %83 : vector<8xf32> to vector<8x1xf32>
    %85 = vector.broadcast %84 : vector<8x1xf32> to vector<8x16xf32>
    %86 = arith.subf %82, %85 : vector<8x16xf32>
    %87 = math.exp %86 : vector<8x16xf32>
    %cst_49 = arith.constant dense<0.000000e+00> : vector<8xf32>
    %88 = vector.multi_reduction <add>, %87, %cst_49 [1] : vector<8x16xf32> to vector<8xf32>
    %89 = vector.shape_cast %88 : vector<8xf32> to vector<8x1xf32>
    %90 = tpu.reciprocal %89 {approx = true} : vector<8x1xf32> -> vector<8x1xf32>
    %91 = vector.broadcast %90 : vector<8x1xf32> to vector<8x16xf32>
    %92 = arith.mulf %87, %91 : vector<8x16xf32>
    %93 = arith.truncf %92 : vector<8x16xf32> to vector<8x16xbf16>
    %c0_50 = arith.constant 0 : index
    %c3 = arith.constant 3 : index
    %c0_51 = arith.constant 0 : index
    %c0_52 = arith.constant 0 : index
    %94 = vector.load %arg21[%c0_50, %c3, %c0_51, %c0_52] : memref<1x4x8x16xbf16, #tpu.memory_space<vmem>>, vector<1x1x8x16xbf16>
    %95 = vector.shape_cast %94 : vector<1x1x8x16xbf16> to vector<8x16xbf16>
    %96 = vector.shape_cast %93 : vector<8x16xbf16> to vector<1x1x8x16xbf16>
    tpu.vector_store %arg21[%c0_50, %c3, %c0_51, %c0_52], %96 {strides = array<i32>} : memref<1x4x8x16xbf16, #tpu.memory_space<vmem>>, vector<1x1x8x16xbf16>,
    %c0_53 = arith.constant 0 : index
    %c24_54 = arith.constant 24 : index
    %97 = vector.load %arg23[%c0_53, %c24_54] : memref<16x32xbf16, #tpu.memory_space<vmem>>, vector<16x8xbf16>
    %98 = arith.truncf %92 : vector<8x16xf32> to vector<8x16xbf16>
    %cst_55 = arith.constant dense<0.000000e+00> : vector<8x8xf32>
    %99 = tpu.matmul %98, %97, %cst_55 {dimension_numbers = #tpu.dot_dimension_numbers<[1], [0], [0], [1], [0, 0, 1, 1], [], []>} : vector<8x16xbf16>, vector<16x8xbf16>, vector<8x8xf32> -> vector<8x8xf32>
    %100 = arith.truncf %99 : vector<8x8xf32> to vector<8x8xbf16>
    %c0_56 = arith.constant 0 : index
    %c24_57 = arith.constant 24 : index
    %101 = vector.load %arg24[%c0_56, %c24_57] : memref<8x32xbf16, #tpu.memory_space<vmem>>, vector<8x8xbf16>
    tpu.vector_store %arg24[%c0_56, %c24_57], %100 {strides = array<i32>} : memref<8x32xbf16, #tpu.memory_space<vmem>>, vector<8x8xbf16>,
    %c0_58 = arith.constant 0 : index
    %c0_59 = arith.constant 0 : index
    %102 = vector.load %arg24[%c0_58, %c0_59] : memref<8x32xbf16, #tpu.memory_space<vmem>>, vector<8x32xbf16>
    %c0_60 = arith.constant 0 : index
    %c0_61 = arith.constant 0 : index
    %103 = vector.load %arg10[%c0_60, %c0_61] : memref<32x32xbf16, #tpu.memory_space<vmem>>, vector<32x32xbf16>
    %cst_62 = arith.constant dense<0.000000e+00> : vector<8x32xf32>
    %104 = tpu.matmul %102, %103, %cst_62 {dimension_numbers = #tpu.dot_dimension_numbers<[1], [0], [0], [1], [0, 0, 1, 1], [], []>} : vector<8x32xbf16>, vector<32x32xbf16>, vector<8x32xf32> -> vector<8x32xf32>
    %c0_63 = arith.constant 0 : index
    %c0_64 = arith.constant 0 : index
    %105 = vector.load %arg11[%c0_63, %c0_64] : memref<1x32xf32, #tpu.memory_space<vmem>>, vector<1x32xf32>
    %106 = vector.broadcast %105 : vector<1x32xf32> to vector<8x32xf32>
    %107 = arith.addf %104, %106 : vector<8x32xf32>
    %108 = arith.addf %107, %4 : vector<8x32xf32>
    %c0_65 = arith.constant 0 : index
    %c0_66 = arith.constant 0 : index
    %109 = vector.load %arg12[%c0_65, %c0_66] : memref<1x32xf32, #tpu.memory_space<vmem>>, vector<1x32xf32>
    %c0_67 = arith.constant 0 : index
    %c0_68 = arith.constant 0 : index
    %110 = vector.load %arg13[%c0_67, %c0_68] : memref<1x32xf32, #tpu.memory_space<vmem>>, vector<1x32xf32>
    %cst_69 = arith.constant dense<0.000000e+00> : vector<8xf32>
    %111 = vector.multi_reduction <add>, %108, %cst_69 [1] : vector<8x32xf32> to vector<8xf32>
    %112 = vector.shape_cast %111 : vector<8xf32> to vector<8x1xf32>
    %cst_70 = arith.constant 3.200000e+01 : f32
    %113 = vector.broadcast %cst_70 : f32 to vector<8x1xf32>
    %114 = arith.divf %112, %113 : vector<8x1xf32>
    %115 = vector.broadcast %114 : vector<8x1xf32> to vector<8x32xf32>
    %116 = arith.subf %108, %115 : vector<8x32xf32>
    %117 = arith.mulf %116, %116 : vector<8x32xf32>
    %cst_71 = arith.constant dense<0.000000e+00> : vector<8xf32>
    %118 = vector.multi_reduction <add>, %117, %cst_71 [1] : vector<8x32xf32> to vector<8xf32>
    %119 = vector.shape_cast %118 : vector<8xf32> to vector<8x1xf32>
    %cst_72 = arith.constant 3.200000e+01 : f32
    %120 = vector.broadcast %cst_72 : f32 to vector<8x1xf32>
    %121 = arith.divf %119, %120 : vector<8x1xf32>
    %122 = vector.broadcast %114 : vector<8x1xf32> to vector<8x32xf32>
    %123 = arith.subf %108, %122 : vector<8x32xf32>
    %cst_73 = arith.constant 9.99999997E-7 : f32
    %124 = vector.broadcast %cst_73 : f32 to vector<8x1xf32>
    %125 = arith.addf %121, %124 : vector<8x1xf32>
    %126 = math.rsqrt %125 : vector<8x1xf32>
    %127 = vector.broadcast %126 : vector<8x1xf32> to vector<8x32xf32>
    %128 = arith.mulf %123, %127 : vector<8x32xf32>
    %129 = vector.broadcast %109 : vector<1x32xf32> to vector<8x32xf32>
    %130 = arith.mulf %128, %129 : vector<8x32xf32>
    %131 = vector.broadcast %110 : vector<1x32xf32> to vector<8x32xf32>
    %132 = arith.addf %130, %131 : vector<8x32xf32>
    %133 = arith.truncf %132 : vector<8x32xf32> to vector<8x32xbf16>
    %c0_74 = arith.constant 0 : index
    %c0_75 = arith.constant 0 : index
    %134 = vector.load %arg14[%c0_74, %c0_75] : memref<32x64xbf16, #tpu.memory_space<vmem>>, vector<32x64xbf16>
    %cst_76 = arith.constant dense<0.000000e+00> : vector<8x64xf32>
    %135 = tpu.matmul %133, %134, %cst_76 {dimension_numbers = #tpu.dot_dimension_numbers<[1], [0], [0], [1], [0, 0, 1, 1], [], []>} : vector<8x32xbf16>, vector<32x64xbf16>, vector<8x64xf32> -> vector<8x64xf32>
    %c0_77 = arith.constant 0 : index
    %c0_78 = arith.constant 0 : index
    %136 = vector.load %arg15[%c0_77, %c0_78] : memref<1x64xf32, #tpu.memory_space<vmem>>, vector<1x64xf32>
    %137 = vector.broadcast %136 : vector<1x64xf32> to vector<8x64xf32>
    %138 = arith.addf %135, %137 : vector<8x64xf32>
    %cst_79 = arith.constant 0.000000e+00 : f32
    %139 = vector.broadcast %cst_79 : f32 to vector<8x64xf32>
    %140 = arith.maximumf %138, %139 : vector<8x64xf32>
    %141 = arith.truncf %140 : vector<8x64xf32> to vector<8x64xbf16>
    %c0_80 = arith.constant 0 : index
    %c0_81 = arith.constant 0 : index
    %142 = vector.load %arg16[%c0_80, %c0_81] : memref<64x32xbf16, #tpu.memory_space<vmem>>, vector<64x32xbf16>
    %cst_82 = arith.constant dense<0.000000e+00> : vector<8x32xf32>
    %143 = tpu.matmul %141, %142, %cst_82 {dimension_numbers = #tpu.dot_dimension_numbers<[1], [0], [0], [1], [0, 0, 1, 1], [], []>} : vector<8x64xbf16>, vector<64x32xbf16>, vector<8x32xf32> -> vector<8x32xf32>
    %c0_83 = arith.constant 0 : index
    %c0_84 = arith.constant 0 : index
    %144 = vector.load %arg17[%c0_83, %c0_84] : memref<1x32xf32, #tpu.memory_space<vmem>>, vector<1x32xf32>
    %145 = vector.broadcast %144 : vector<1x32xf32> to vector<8x32xf32>
    %146 = arith.addf %143, %145 : vector<8x32xf32>
    %147 = arith.addf %146, %132 : vector<8x32xf32>
    %c0_85 = arith.constant 0 : index
    %c0_86 = arith.constant 0 : index
    %148 = vector.load %arg18[%c0_85, %c0_86] : memref<1x32xf32, #tpu.memory_space<vmem>>, vector<1x32xf32>
    %c0_87 = arith.constant 0 : index
    %c0_88 = arith.constant 0 : index
    %149 = vector.load %arg19[%c0_87, %c0_88] : memref<1x32xf32, #tpu.memory_space<vmem>>, vector<1x32xf32>
    %cst_89 = arith.constant dense<0.000000e+00> : vector<8xf32>
    %150 = vector.multi_reduction <add>, %147, %cst_89 [1] : vector<8x32xf32> to vector<8xf32>
    %151 = vector.shape_cast %150 : vector<8xf32> to vector<8x1xf32>
    %cst_90 = arith.constant 3.200000e+01 : f32
    %152 = vector.broadcast %cst_90 : f32 to vector<8x1xf32>
    %153 = arith.divf %151, %152 : vector<8x1xf32>
    %154 = vector.broadcast %153 : vector<8x1xf32> to vector<8x32xf32>
    %155 = arith.subf %147, %154 : vector<8x32xf32>
    %156 = arith.mulf %155, %155 : vector<8x32xf32>
    %cst_91 = arith.constant dense<0.000000e+00> : vector<8xf32>
    %157 = vector.multi_reduction <add>, %156, %cst_91 [1] : vector<8x32xf32> to vector<8xf32>
    %158 = vector.shape_cast %157 : vector<8xf32> to vector<8x1xf32>
    %cst_92 = arith.constant 3.200000e+01 : f32
    %159 = vector.broadcast %cst_92 : f32 to vector<8x1xf32>
    %160 = arith.divf %158, %159 : vector<8x1xf32>
    %161 = vector.broadcast %153 : vector<8x1xf32> to vector<8x32xf32>
    %162 = arith.subf %147, %161 : vector<8x32xf32>
    %cst_93 = arith.constant 9.99999997E-7 : f32
    %163 = vector.broadcast %cst_93 : f32 to vector<8x1xf32>
    %164 = arith.addf %160, %163 : vector<8x1xf32>
    %165 = math.rsqrt %164 : vector<8x1xf32>
    %166 = vector.broadcast %165 : vector<8x1xf32> to vector<8x32xf32>
    %167 = arith.mulf %162, %166 : vector<8x32xf32>
    %168 = vector.broadcast %148 : vector<1x32xf32> to vector<8x32xf32>
    %169 = arith.mulf %167, %168 : vector<8x32xf32>
    %170 = vector.broadcast %149 : vector<1x32xf32> to vector<8x32xf32>
    %171 = arith.addf %169, %170 : vector<8x32xf32>
    %c0_94 = arith.constant 0 : index
    %c0_95 = arith.constant 0 : index
    %c0_96 = arith.constant 0 : index
    %172 = vector.load %arg20[%c0_94, %c0_95, %c0_96] : memref<1x8x32xf32, #tpu.memory_space<vmem>>, vector<1x8x32xf32>
    %173 = vector.shape_cast %172 : vector<1x8x32xf32> to vector<8x32xf32>
    %174 = vector.shape_cast %171 : vector<8x32xf32> to vector<1x8x32xf32>
    tpu.vector_store %arg20[%c0_94, %c0_95, %c0_96], %174 {strides = array<i32>} : memref<1x8x32xf32, #tpu.memory_space<vmem>>, vector<1x8x32xf32>,
    return
  }
  func.func @transform_0(%arg0: i32, %arg1: i32) -> (i32, i32, i32) {
    %c0_i32 = arith.constant 0 : i32
    %c0_i32_0 = arith.constant 0 : i32
    %c0_i32_1 = arith.constant 0 : i32
    return %arg0, %c0_i32, %c0_i32_0 : i32, i32, i32
  }
  func.func @transform_1(%arg0: i32, %arg1: i32) -> (i32, i32, i32) {
    %c0_i32 = arith.constant 0 : i32
    %c0_i32_0 = arith.constant 0 : i32
    return %arg0, %arg1, %c0_i32 : i32, i32, i32
  }
  func.func @transform_2(%arg0: i32, %arg1: i32) -> (i32, i32) {
    %c0_i32 = arith.constant 0 : i32
    %c0_i32_0 = arith.constant 0 : i32
    %c0_i32_1 = arith.constant 0 : i32
    return %c0_i32, %c0_i32_0 : i32, i32
  }
  func.func @transform_3(%arg0: i32, %arg1: i32) -> (i32, i32) {
    %c0_i32 = arith.constant 0 : i32
    %c0_i32_0 = arith.constant 0 : i32
    %c0_i32_1 = arith.constant 0 : i32
    return %c0_i32, %c0_i32_0 : i32, i32
  }
  func.func @transform_4(%arg0: i32, %arg1: i32) -> (i32, i32) {
    %c0_i32 = arith.constant 0 : i32
    %c0_i32_0 = arith.constant 0 : i32
    %c0_i32_1 = arith.constant 0 : i32
    return %c0_i32, %c0_i32_0 : i32, i32
  }
  func.func @transform_5(%arg0: i32, %arg1: i32) -> (i32, i32) {
    %c0_i32 = arith.constant 0 : i32
    %c0_i32_0 = arith.constant 0 : i32
    %c0_i32_1 = arith.constant 0 : i32
    return %c0_i32, %c0_i32_0 : i32, i32
  }
  func.func @transform_6(%arg0: i32, %arg1: i32) -> (i32, i32) {
    %c0_i32 = arith.constant 0 : i32
    %c0_i32_0 = arith.constant 0 : i32
    %c0_i32_1 = arith.constant 0 : i32
    return %c0_i32, %c0_i32_0 : i32, i32
  }
  func.func @transform_7(%arg0: i32, %arg1: i32) -> (i32, i32) {
    %c0_i32 = arith.constant 0 : i32
    %c0_i32_0 = arith.constant 0 : i32
    %c0_i32_1 = arith.constant 0 : i32
    return %c0_i32, %c0_i32_0 : i32, i32
  }
  func.func @transform_8(%arg0: i32, %arg1: i32) -> (i32, i32) {
    %c0_i32 = arith.constant 0 : i32
    %c0_i32_0 = arith.constant 0 : i32
    %c0_i32_1 = arith.constant 0 : i32
    return %c0_i32, %c0_i32_0 : i32, i32
  }
  func.func @transform_9(%arg0: i32, %arg1: i32) -> (i32, i32) {
    %c0_i32 = arith.constant 0 : i32
    %c0_i32_0 = arith.constant 0 : i32
    %c0_i32_1 = arith.constant 0 : i32
    return %c0_i32, %c0_i32_0 : i32, i32
  }
  func.func @transform_10(%arg0: i32, %arg1: i32) -> (i32, i32) {
    %c0_i32 = arith.constant 0 : i32
    %c0_i32_0 = arith.constant 0 : i32
    %c0_i32_1 = arith.constant 0 : i32
    return %c0_i32, %c0_i32_0 : i32, i32
  }
  func.func @transform_11(%arg0: i32, %arg1: i32) -> (i32, i32) {
    %c0_i32 = arith.constant 0 : i32
    %c0_i32_0 = arith.constant 0 : i32
    %c0_i32_1 = arith.constant 0 : i32
    return %c0_i32, %c0_i32_0 : i32, i32
  }
  func.func @transform_12(%arg0: i32, %arg1: i32) -> (i32, i32) {
    %c0_i32 = arith.constant 0 : i32
    %c0_i32_0 = arith.constant 0 : i32
    %c0_i32_1 = arith.constant 0 : i32
    return %c0_i32, %c0_i32_0 : i32, i32
  }
  func.func @transform_13(%arg0: i32, %arg1: i32) -> (i32, i32) {
    %c0_i32 = arith.constant 0 : i32
    %c0_i32_0 = arith.constant 0 : i32
    %c0_i32_1 = arith.constant 0 : i32
    return %c0_i32, %c0_i32_0 : i32, i32
  }
  func.func @transform_14(%arg0: i32, %arg1: i32) -> (i32, i32) {
    %c0_i32 = arith.constant 0 : i32
    %c0_i32_0 = arith.constant 0 : i32
    %c0_i32_1 = arith.constant 0 : i32
    return %c0_i32, %c0_i32_0 : i32, i32
  }
  func.func @transform_15(%arg0: i32, %arg1: i32) -> (i32, i32) {
    %c0_i32 = arith.constant 0 : i32
    %c0_i32_0 = arith.constant 0 : i32
    %c0_i32_1 = arith.constant 0 : i32
    return %c0_i32, %c0_i32_0 : i32, i32
  }
  func.func @transform_16(%arg0: i32, %arg1: i32) -> (i32, i32) {
    %c0_i32 = arith.constant 0 : i32
    %c0_i32_0 = arith.constant 0 : i32
    %c0_i32_1 = arith.constant 0 : i32
    return %c0_i32, %c0_i32_0 : i32, i32
  }
  func.func @transform_17(%arg0: i32, %arg1: i32) -> (i32, i32) {
    %c0_i32 = arith.constant 0 : i32
    %c0_i32_0 = arith.constant 0 : i32
    %c0_i32_1 = arith.constant 0 : i32
    return %c0_i32, %c0_i32_0 : i32, i32
  }
  func.func @transform_18(%arg0: i32, %arg1: i32) -> (i32, i32, i32) {
    %c0_i32 = arith.constant 0 : i32
    %c0_i32_0 = arith.constant 0 : i32
    return %arg0, %arg1, %c0_i32 : i32, i32, i32
  }
  func.func @transform_19(%arg0: i32, %arg1: i32) -> (i32, i32, i32, i32) {
    %c0_i32 = arith.constant 0 : i32
    %c0_i32_0 = arith.constant 0 : i32
    %c0_i32_1 = arith.constant 0 : i32
    return %arg0, %c0_i32, %arg1, %c0_i32_0 : i32, i32, i32, i32
  }
}

</mosaic_0001>

<llo_original>
// kernel: tpu_custom_call.1
$region0: #{tpu_custom_call.1}
  #allocation0 [shape = 'u32[]', space=smem, size = 0x4, offset = 0x4, fixed_abs, tag = 'smem constant byte address 0x4 - core index']
  #allocation1 [shape = 'u32[144,128]{1,0:T(1,128)}', space=vmem, size = 0x12000, scoped, tag = 'internal scratch']
  #allocation2 [shape = 'bf16[16,32]{1,0:T(8,128)(2,1)}', space=vmem, size = 0x1000, scoped, tag = 'scratch operand']
  #allocation3 [shape = 'bf16[16,32]{1,0:T(8,128)(2,1)}', space=vmem, size = 0x1000, scoped, tag = 'scratch operand']
  #allocation4 [shape = 'bf16[8,32]{1,0:T(8,128)(2,1)}', space=vmem, size = 0x800, scoped, tag = 'scratch operand']
  %s0 = inlined_call_operand.vmem [shape: f32[2,16,32], index: 0, kind: input, shape index: {}]
  %s1 = inlined_call_operand.hbm [shape: f32[2,16,32], index: 1, kind: input, shape index: {}]
  %s2 = inlined_call_operand.vmem [shape: bf16[32,32], index: 2, kind: input, shape index: {}]
  %s3 = inlined_call_operand.vmem [shape: f32[1,32], index: 3, kind: input, shape index: {}]
  %s4 = inlined_call_operand.hbm [shape: bf16[32,32], index: 4, kind: input, shape index: {}]
  %s5 = inlined_call_operand.vmem [shape: f32[1,32], index: 5, kind: input, shape index: {}]
  %s6 = inlined_call_operand.hbm [shape: bf16[32,32], index: 6, kind: input, shape index: {}]
  %s7 = inlined_call_operand.vmem [shape: f32[1,32], index: 7, kind: input, shape index: {}]
  %s8 = inlined_call_operand.hbm [shape: bf16[32,32], index: 8, kind: input, shape index: {}]
  %s9 = inlined_call_operand.vmem [shape: f32[1,32], index: 9, kind: input, shape index: {}]
  %s10 = inlined_call_operand.vmem [shape: f32[1,32], index: 10, kind: input, shape index: {}]
  %s11 = inlined_call_operand.vmem [shape: f32[1,32], index: 11, kind: input, shape index: {}]
  %s12 = inlined_call_operand.hbm [shape: bf16[32,64], index: 12, kind: input, shape index: {}]
  %s13 = inlined_call_operand.vmem [shape: f32[1,64], index: 13, kind: input, shape index: {}]
  %s14 = inlined_call_operand.vmem [shape: bf16[64,32], index: 14, kind: input, shape index: {}]
  %s15 = inlined_call_operand.vmem [shape: f32[1,32], index: 15, kind: input, shape index: {}]
  %s16 = inlined_call_operand.vmem [shape: f32[1,32], index: 16, kind: input, shape index: {}]
  %s17 = inlined_call_operand.vmem [shape: f32[1,32], index: 17, kind: input, shape index: {}]
  %s18 = inlined_call_operand.hbm [shape: f32[2,16,32], index: 18, kind: output, shape index: {0}]
  %s19 = inlined_call_operand.hbm [shape: bf16[2,4,16,16], index: 19, kind: output, shape index: {1}]
  %20 = xla_tuple %s18, %s19
  %s21 = sld [smem:[#allocation0]]
  $region137: #{tpu_custom_call.1} parent=0
    _
  %s23 = ssub.s32 1, %s21
  %s24 = scalar_select 0, %s23, %s21
  $region1: #{tpu_custom_call.1} parent=0
    #allocation5 [shape = 'u8[8192]{0}', space=vmem, size = 0x2000, scoped, tag = 'input window, operand 1']
    #allocation6 [shape = 's32[2]{0}', space=sflag, size = 0x8, scoped, tag = 'scoped memory for tpu_custom_call.1']
    #allocation7 [shape = 's32[2]{0}', space=sflag, size = 0x8, scoped, tag = 'scoped memory for tpu_custom_call.1']
    #allocation8 [shape = 'u8[8192]{0}', space=vmem, size = 0x2000, scoped, tag = 'input window, operand 4, single buffered']
    #allocation9 [shape = 's32[1]{0}', space=sflag, size = 0x4, scoped, tag = 'scoped memory for tpu_custom_call.1']
    #allocation10 [shape = 'u8[8192]{0}', space=vmem, size = 0x2000, scoped, tag = 'input window, operand 6, single buffered']
    #allocation11 [shape = 'u8[8192]{0}', space=vmem, size = 0x2000, scoped, tag = 'input window, operand 8, single buffered']
    #allocation12 [shape = 's32[1]{0}', space=sflag, size = 0x4, scoped, tag = 'scoped memory for tpu_custom_call.1']
    #allocation13 [shape = 'u8[8192]{0}', space=vmem, size = 0x2000, scoped, tag = 'input window, operand 12, single buffered']
    #allocation14 [shape = 'u8[8192]{0}', space=vmem, size = 0x2000, scoped, tag = 'output window, operand 0']
    #allocation15 [shape = 'u8[16384]{0}', space=vmem, size = 0x4000, scoped, tag = 'output window, operand 1']
    #allocation16 [shape = 's32[2]{0}', space=sflag, size = 0x8, scoped, tag = 'scoped memory for tpu_custom_call.1']
    %25 = vsyncpa [#allocation6], 0
    %s26 = scalar_lea.sflag [#allocation6], 1
    %27 = vsyncpa %s26, 0
    %28 = vsyncpa [#allocation9], 0
    %29 = vsyncpa [#allocation12], 0
    %30 = vsyncpa [#allocation7], 0
    %s31 = scalar_lea.sflag [#allocation7], 1
    %32 = vsyncpa %s31, 0
    %33 = vsyncpa [#allocation16], 0
    %s34 = scalar_lea.sflag [#allocation16], 1
    %35 = vsyncpa %s34, 0
    loop: start=0, step=1, limit=6
    $region2: #{tpu_custom_call.1} parent=1 // loop_pre_header
      _
    $region3: #{tpu_custom_call.1} parent=1 // loop_header
      %s37 = sphi 0, %s41
      %p38 = scmp.ge.s32.totalorder %s37, 6
      %s44 = sphi 0, %s56
      %s45 = sphi 0, %s52
      %s46 = sphi 0, %s44
      %s47 = sphi 0, %s45
      %s48 = sphi 0, %s46
      %s49 = sphi 0, %s47
      %s59 = sphi 0, %s61
      %s62 = sphi 0, %s59
      %s63 = sphi 0, %s62
      %s79 = sphi 0, %s63
      %s87 = sphi 0, %s89
      %s90 = sphi 0, %s87
      %s91 = sphi 0, %s90
      %s107 = sphi 0, %s91
      %s111 = sphi 0, %s111
      %s113 = sphi 0, %s111
      %s114 = sphi 0, %s113
      %s128 = sphi 0, %s114
      %s132 = sphi 0, %s132
      %s134 = sphi 0, %s132
      %s135 = sphi 0, %s134
      %s149 = sphi 0, %s135
      %s153 = sphi 0, %s153
      %s155 = sphi 0, %s153
      %s156 = sphi 0, %s155
      %s170 = sphi 0, %s156
      %s174 = sphi 0, %s174
      %s176 = sphi 0, %s174
      %s177 = sphi 0, %s176
      %s191 = sphi 0, %s177
      %s195 = sphi 0, %s195
      %s197 = sphi 0, %s195
      %s198 = sphi 0, %s197
      %s212 = sphi 0, %s198
      %s216 = sphi 0, %s216
      %s218 = sphi 0, %s216
      %s219 = sphi 0, %s218
      %s233 = sphi 0, %s219
      %s237 = sphi 0, %s237
      %s239 = sphi 0, %s237
      %s240 = sphi 0, %s239
      %s254 = sphi 0, %s240
      %s258 = sphi 0, %s258
      %s260 = sphi 0, %s258
      %s261 = sphi 0, %s260
      %s275 = sphi 0, %s261
      %s279 = sphi 0, %s279
      %s281 = sphi 0, %s279
      %s282 = sphi 0, %s281
      %s296 = sphi 0, %s282
      %s300 = sphi 0, %s300
      %s302 = sphi 0, %s300
      %s303 = sphi 0, %s302
      %s317 = sphi 0, %s303
      %s321 = sphi 0, %s321
      %s323 = sphi 0, %s321
      %s324 = sphi 0, %s323
      %s338 = sphi 0, %s324
      %s342 = sphi 0, %s342
      %s344 = sphi 0, %s342
      %s345 = sphi 0, %s344
      %s359 = sphi 0, %s345
      %s363 = sphi 0, %s363
      %s365 = sphi 0, %s363
      %s366 = sphi 0, %s365
      %s380 = sphi 0, %s366
      %s384 = sphi 0, %s384
      %s386 = sphi 0, %s384
      %s387 = sphi 0, %s386
      %s401 = sphi 0, %s387
      %s405 = sphi 0, %s405
      %s407 = sphi 0, %s405
      %s408 = sphi 0, %s407
      %s422 = sphi 0, %s408
      %s426 = sphi 0, %s426
      %s428 = sphi 0, %s426
      %s429 = sphi 0, %s428
      %s443 = sphi 0, %s429
      %s451 = sphi 0, %s453
      %s454 = sphi 0, %s451
      %s455 = sphi 0, %s454
      %s471 = sphi 0, %s455
      %s479 = sphi 0, %s481
      %s482 = sphi 0, %s479
      %s483 = sphi 0, %s482
      %s499 = sphi 0, %s483
    $region4: #{tpu_custom_call.1} parent=1 // loop_header_branch
      %40 = sbr.rel (%p38) target = $region8
    $region5: #{tpu_custom_call.1} parent=1 // loop_body
      %s42 = ssub.s32 %s37, 1
      %s43 = ssub.s32 %s37, 2
      %s50 = sadd.s32 1, %s45
      %p51 = scmp.ge.s32.totalorder %s50, 2
      %s52 = scalar_select %p51, 0, %s50
      %s53 = sadd.s32 1, %s44
      %s54 = scalar_select %p51, %s53, %s44
      %p55 = scmp.ge.s32.totalorder %s54, 2
      %s56 = scalar_select %p55, 0, %s54
      %s57 = ssub.s32 %s44, %s56
      %p58 = scmp.eq.s32.totalorder %s57, 0
      %s60 = sadd.s32 %s59, 1
      %s61 = scalar_select %p58, %s59, %s60
      %p64 = pneg %p58
      %p65 = scmp.eq.s32.totalorder %s37, 3
      %p66 = por %p64, %p65
      %p67 = scmp.ne.s32.totalorder %s59, %s62
      %p68 = scmp.eq.s32.totalorder %s37, 0
      %p69 = por %p67, %p68
      %p70 = scmp.ne.s32.totalorder %s59, %s62
      %p71 = scmp.eq.s32.totalorder %s42, 3
      %p72 = por %p70, %p71
      %p73 = scmp.ne.s32.totalorder %s62, %s63
      %p74 = scmp.eq.s32.totalorder %s42, 0
      %p75 = por %p73, %p74
      %p76 = scmp.ne.s32.totalorder %s62, %s63
      %p77 = scmp.eq.s32.totalorder %s43, 3
      %p78 = por %p76, %p77
      %p80 = scmp.ne.s32.totalorder %s63, %s79
      %p81 = scmp.eq.s32.totalorder %s43, 0
      %p82 = por %p80, %p81
      %s83 = ssub.s32 %s44, %s56
      %s84 = ssub.s32 %s45, %s52
      %s85 = sor.u32 %s83, %s84
      %p86 = scmp.eq.s32.totalorder %s85, 0
      %s88 = sadd.s32 %s87, 1
      %s89 = scalar_select %p86, %s87, %s88
      %p92 = pneg %p86
      %p93 = scmp.eq.s32.totalorder %s37, 3
      %p94 = por %p92, %p93
      %p95 = scmp.ne.s32.totalorder %s87, %s90
      %p96 = scmp.eq.s32.totalorder %s37, 0
      %p97 = por %p95, %p96
      %p98 = scmp.ne.s32.totalorder %s87, %s90
      %p99 = scmp.eq.s32.totalorder %s42, 3
      %p100 = por %p98, %p99
      %p101 = scmp.ne.s32.totalorder %s90, %s91
      %p102 = scmp.eq.s32.totalorder %s42, 0
      %p103 = por %p101, %p102
      %p104 = scmp.ne.s32.totalorder %s90, %s91
      %p105 = scmp.eq.s32.totalorder %s43, 3
      %p106 = por %p104, %p105
      %p108 = scmp.ne.s32.totalorder %s91, %s107
      %p109 = scmp.eq.s32.totalorder %s43, 0
      %p110 = por %p108, %p109
      %s112 = sadd.s32 %s111, 1
      %p115 = scmp.eq.s32.totalorder %s37, 3
      %p116 = scmp.ne.s32.totalorder %s111, %s113
      %p117 = scmp.eq.s32.totalorder %s37, 0
      %p118 = por %p116, %p117
      %p119 = scmp.ne.s32.totalorder %s111, %s113
      %p120 = scmp.eq.s32.totalorder %s42, 3
      %p121 = por %p119, %p120
      %p122 = scmp.ne.s32.totalorder %s113, %s114
      %p123 = scmp.eq.s32.totalorder %s42, 0
      %p124 = por %p122, %p123
      %p125 = scmp.ne.s32.totalorder %s113, %s114
      %p126 = scmp.eq.s32.totalorder %s43, 3
      %p127 = por %p125, %p126
      %p129 = scmp.ne.s32.totalorder %s114, %s128
      %p130 = scmp.eq.s32.totalorder %s43, 0
      %p131 = por %p129, %p130
      %s133 = sadd.s32 %s132, 1
      %p136 = scmp.eq.s32.totalorder %s37, 3
      %p137 = scmp.ne.s32.totalorder %s132, %s134
      %p138 = scmp.eq.s32.totalorder %s37, 0
      %p139 = por %p137, %p138
      %p140 = scmp.ne.s32.totalorder %s132, %s134
      %p141 = scmp.eq.s32.totalorder %s42, 3
      %p142 = por %p140, %p141
      %p143 = scmp.ne.s32.totalorder %s134, %s135
      %p144 = scmp.eq.s32.totalorder %s42, 0
      %p145 = por %p143, %p144
      %p146 = scmp.ne.s32.totalorder %s134, %s135
      %p147 = scmp.eq.s32.totalorder %s43, 3
      %p148 = por %p146, %p147
      %p150 = scmp.ne.s32.totalorder %s135, %s149
      %p151 = scmp.eq.s32.totalorder %s43, 0
      %p152 = por %p150, %p151
      %s154 = sadd.s32 %s153, 1
      %p157 = scmp.eq.s32.totalorder %s37, 3
      %p158 = scmp.ne.s32.totalorder %s153, %s155
      %p159 = scmp.eq.s32.totalorder %s37, 0
      %p160 = por %p158, %p159
      %p161 = scmp.ne.s32.totalorder %s153, %s155
      %p162 = scmp.eq.s32.totalorder %s42, 3
      %p163 = por %p161, %p162
      %p164 = scmp.ne.s32.totalorder %s155, %s156
      %p165 = scmp.eq.s32.totalorder %s42, 0
      %p166 = por %p164, %p165
      %p167 = scmp.ne.s32.totalorder %s155, %s156
      %p168 = scmp.eq.s32.totalorder %s43, 3
      %p169 = por %p167, %p168
      %p171 = scmp.ne.s32.totalorder %s156, %s170
      %p172 = scmp.eq.s32.totalorder %s43, 0
      %p173 = por %p171, %p172
      %s175 = sadd.s32 %s174, 1
      %p178 = scmp.eq.s32.totalorder %s37, 3
      %p179 = scmp.ne.s32.totalorder %s174, %s176
      %p180 = scmp.eq.s32.totalorder %s37, 0
      %p181 = por %p179, %p180
      %p182 = scmp.ne.s32.totalorder %s174, %s176
      %p183 = scmp.eq.s32.totalorder %s42, 3
      %p184 = por %p182, %p183
      %p185 = scmp.ne.s32.totalorder %s176, %s177
      %p186 = scmp.eq.s32.totalorder %s42, 0
      %p187 = por %p185, %p186
      %p188 = scmp.ne.s32.totalorder %s176, %s177
      %p189 = scmp.eq.s32.totalorder %s43, 3
      %p190 = por %p188, %p189
      %p192 = scmp.ne.s32.totalorder %s177, %s191
      %p193 = scmp.eq.s32.totalorder %s43, 0
      %p194 = por %p192, %p193
      %s196 = sadd.s32 %s195, 1
      %p199 = scmp.eq.s32.totalorder %s37, 3
      %p200 = scmp.ne.s32.totalorder %s195, %s197
      %p201 = scmp.eq.s32.totalorder %s37, 0
      %p202 = por %p200, %p201
      %p203 = scmp.ne.s32.totalorder %s195, %s197
      %p204 = scmp.eq.s32.totalorder %s42, 3
      %p205 = por %p203, %p204
      %p206 = scmp.ne.s32.totalorder %s197, %s198
      %p207 = scmp.eq.s32.totalorder %s42, 0
      %p208 = por %p206, %p207
      %p209 = scmp.ne.s32.totalorder %s197, %s198
      %p210 = scmp.eq.s32.totalorder %s43, 3
      %p211 = por %p209, %p210
      %p213 = scmp.ne.s32.totalorder %s198, %s212
      %p214 = scmp.eq.s32.totalorder %s43, 0
      %p215 = por %p213, %p214
      %s217 = sadd.s32 %s216, 1
      %p220 = scmp.eq.s32.totalorder %s37, 3
      %p221 = scmp.ne.s32.totalorder %s216, %s218
      %p222 = scmp.eq.s32.totalorder %s37, 0
      %p223 = por %p221, %p222
      %p224 = scmp.ne.s32.totalorder %s216, %s218
      %p225 = scmp.eq.s32.totalorder %s42, 3
      %p226 = por %p224, %p225
      %p227 = scmp.ne.s32.totalorder %s218, %s219
      %p228 = scmp.eq.s32.totalorder %s42, 0
      %p229 = por %p227, %p228
      %p230 = scmp.ne.s32.totalorder %s218, %s219
      %p231 = scmp.eq.s32.totalorder %s43, 3
      %p232 = por %p230, %p231
      %p234 = scmp.ne.s32.totalorder %s219, %s233
      %p235 = scmp.eq.s32.totalorder %s43, 0
      %p236 = por %p234, %p235
      %s238 = sadd.s32 %s237, 1
      %p241 = scmp.eq.s32.totalorder %s37, 3
      %p242 = scmp.ne.s32.totalorder %s237, %s239
      %p243 = scmp.eq.s32.totalorder %s37, 0
      %p244 = por %p242, %p243
      %p245 = scmp.ne.s32.totalorder %s237, %s239
      %p246 = scmp.eq.s32.totalorder %s42, 3
      %p247 = por %p245, %p246
      %p248 = scmp.ne.s32.totalorder %s239, %s240
      %p249 = scmp.eq.s32.totalorder %s42, 0
      %p250 = por %p248, %p249
      %p251 = scmp.ne.s32.totalorder %s239, %s240
      %p252 = scmp.eq.s32.totalorder %s43, 3
      %p253 = por %p251, %p252
      %p255 = scmp.ne.s32.totalorder %s240, %s254
      %p256 = scmp.eq.s32.totalorder %s43, 0
      %p257 = por %p255, %p256
      %s259 = sadd.s32 %s258, 1
      %p262 = scmp.eq.s32.totalorder %s37, 3
      %p263 = scmp.ne.s32.totalorder %s258, %s260
      %p264 = scmp.eq.s32.totalorder %s37, 0
      %p265 = por %p263, %p264
      %p266 = scmp.ne.s32.totalorder %s258, %s260
      %p267 = scmp.eq.s32.totalorder %s42, 3
      %p268 = por %p266, %p267
      %p269 = scmp.ne.s32.totalorder %s260, %s261
      %p270 = scmp.eq.s32.totalorder %s42, 0
      %p271 = por %p269, %p270
      %p272 = scmp.ne.s32.totalorder %s260, %s261
      %p273 = scmp.eq.s32.totalorder %s43, 3
      %p274 = por %p272, %p273
      %p276 = scmp.ne.s32.totalorder %s261, %s275
      %p277 = scmp.eq.s32.totalorder %s43, 0
      %p278 = por %p276, %p277
      %s280 = sadd.s32 %s279, 1
      %p283 = scmp.eq.s32.totalorder %s37, 3
      %p284 = scmp.ne.s32.totalorder %s279, %s281
      %p285 = scmp.eq.s32.totalorder %s37, 0
      %p286 = por %p284, %p285
      %p287 = scmp.ne.s32.totalorder %s279, %s281
      %p288 = scmp.eq.s32.totalorder %s42, 3
      %p289 = por %p287, %p288
      %p290 = scmp.ne.s32.totalorder %s281, %s282
      %p291 = scmp.eq.s32.totalorder %s42, 0
      %p292 = por %p290, %p291
      %p293 = scmp.ne.s32.totalorder %s281, %s282
      %p294 = scmp.eq.s32.totalorder %s43, 3
      %p295 = por %p293, %p294
      %p297 = scmp.ne.s32.totalorder %s282, %s296
      %p298 = scmp.eq.s32.totalorder %s43, 0
      %p299 = por %p297, %p298
      %s301 = sadd.s32 %s300, 1
      %p304 = scmp.eq.s32.totalorder %s37, 3
      %p305 = scmp.ne.s32.totalorder %s300, %s302
      %p306 = scmp.eq.s32.totalorder %s37, 0
      %p307 = por %p305, %p306
      %p308 = scmp.ne.s32.totalorder %s300, %s302
      %p309 = scmp.eq.s32.totalorder %s42, 3
      %p310 = por %p308, %p309
      %p311 = scmp.ne.s32.totalorder %s302, %s303
      %p312 = scmp.eq.s32.totalorder %s42, 0
      %p313 = por %p311, %p312
      %p314 = scmp.ne.s32.totalorder %s302, %s303
      %p315 = scmp.eq.s32.totalorder %s43, 3
      %p316 = por %p314, %p315
      %p318 = scmp.ne.s32.totalorder %s303, %s317
      %p319 = scmp.eq.s32.totalorder %s43, 0
      %p320 = por %p318, %p319
      %s322 = sadd.s32 %s321, 1
      %p325 = scmp.eq.s32.totalorder %s37, 3
      %p326 = scmp.ne.s32.totalorder %s321, %s323
      %p327 = scmp.eq.s32.totalorder %s37, 0
      %p328 = por %p326, %p327
      %p329 = scmp.ne.s32.totalorder %s321, %s323
      %p330 = scmp.eq.s32.totalorder %s42, 3
      %p331 = por %p329, %p330
      %p332 = scmp.ne.s32.totalorder %s323, %s324
      %p333 = scmp.eq.s32.totalorder %s42, 0
      %p334 = por %p332, %p333
      %p335 = scmp.ne.s32.totalorder %s323, %s324
      %p336 = scmp.eq.s32.totalorder %s43, 3
      %p337 = por %p335, %p336
      %p339 = scmp.ne.s32.totalorder %s324, %s338
      %p340 = scmp.eq.s32.totalorder %s43, 0
      %p341 = por %p339, %p340
      %s343 = sadd.s32 %s342, 1
      %p346 = scmp.eq.s32.totalorder %s37, 3
      %p347 = scmp.ne.s32.totalorder %s342, %s344
      %p348 = scmp.eq.s32.totalorder %s37, 0
      %p349 = por %p347, %p348
      %p350 = scmp.ne.s32.totalorder %s342, %s344
      %p351 = scmp.eq.s32.totalorder %s42, 3
      %p352 = por %p350, %p351
      %p353 = scmp.ne.s32.totalorder %s344, %s345
      %p354 = scmp.eq.s32.totalorder %s42, 0
      %p355 = por %p353, %p354
      %p356 = scmp.ne.s32.totalorder %s344, %s345
      %p357 = scmp.eq.s32.totalorder %s43, 3
      %p358 = por %p356, %p357
      %p360 = scmp.ne.s32.totalorder %s345, %s359
      %p361 = scmp.eq.s32.totalorder %s43, 0
      %p362 = por %p360, %p361
      %s364 = sadd.s32 %s363, 1
      %p367 = scmp.eq.s32.totalorder %s37, 3
      %p368 = scmp.ne.s32.totalorder %s363, %s365
      %p369 = scmp.eq.s32.totalorder %s37, 0
      %p370 = por %p368, %p369
      %p371 = scmp.ne.s32.totalorder %s363, %s365
      %p372 = scmp.eq.s32.totalorder %s42, 3
      %p373 = por %p371, %p372
      %p374 = scmp.ne.s32.totalorder %s365, %s366
      %p375 = scmp.eq.s32.totalorder %s42, 0
      %p376 = por %p374, %p375
      %p377 = scmp.ne.s32.totalorder %s365, %s366
      %p378 = scmp.eq.s32.totalorder %s43, 3
      %p379 = por %p377, %p378
      %p381 = scmp.ne.s32.totalorder %s366, %s380
      %p382 = scmp.eq.s32.totalorder %s43, 0
      %p383 = por %p381, %p382
      %s385 = sadd.s32 %s384, 1
      %p388 = scmp.eq.s32.totalorder %s37, 3
      %p389 = scmp.ne.s32.totalorder %s384, %s386
      %p390 = scmp.eq.s32.totalorder %s37, 0
      %p391 = por %p389, %p390
      %p392 = scmp.ne.s32.totalorder %s384, %s386
      %p393 = scmp.eq.s32.totalorder %s42, 3
      %p394 = por %p392, %p393
      %p395 = scmp.ne.s32.totalorder %s386, %s387
      %p396 = scmp.eq.s32.totalorder %s42, 0
      %p397 = por %p395, %p396
      %p398 = scmp.ne.s32.totalorder %s386, %s387
      %p399 = scmp.eq.s32.totalorder %s43, 3
      %p400 = por %p398, %p399
      %p402 = scmp.ne.s32.totalorder %s387, %s401
      %p403 = scmp.eq.s32.totalorder %s43, 0
      %p404 = por %p402, %p403
      %s406 = sadd.s32 %s405, 1
      %p409 = scmp.eq.s32.totalorder %s37, 3
      %p410 = scmp.ne.s32.totalorder %s405, %s407
      %p411 = scmp.eq.s32.totalorder %s37, 0
      %p412 = por %p410, %p411
      %p413 = scmp.ne.s32.totalorder %s405, %s407
      %p414 = scmp.eq.s32.totalorder %s42, 3
      %p415 = por %p413, %p414
      %p416 = scmp.ne.s32.totalorder %s407, %s408
      %p417 = scmp.eq.s32.totalorder %s42, 0
      %p418 = por %p416, %p417
      %p419 = scmp.ne.s32.totalorder %s407, %s408
      %p420 = scmp.eq.s32.totalorder %s43, 3
      %p421 = por %p419, %p420
      %p423 = scmp.ne.s32.totalorder %s408, %s422
      %p424 = scmp.eq.s32.totalorder %s43, 0
      %p425 = por %p423, %p424
      %s427 = sadd.s32 %s426, 1
      %p430 = scmp.eq.s32.totalorder %s37, 3
      %p431 = scmp.ne.s32.totalorder %s426, %s428
      %p432 = scmp.eq.s32.totalorder %s37, 0
      %p433 = por %p431, %p432
      %p434 = scmp.ne.s32.totalorder %s426, %s428
      %p435 = scmp.eq.s32.totalorder %s42, 3
      %p436 = por %p434, %p435
      %p437 = scmp.ne.s32.totalorder %s428, %s429
      %p438 = scmp.eq.s32.totalorder %s42, 0
      %p439 = por %p437, %p438
      %p440 = scmp.ne.s32.totalorder %s428, %s429
      %p441 = scmp.eq.s32.totalorder %s43, 3
      %p442 = por %p440, %p441
      %p444 = scmp.ne.s32.totalorder %s429, %s443
      %p445 = scmp.eq.s32.totalorder %s43, 0
      %p446 = por %p444, %p445
      %s447 = ssub.s32 %s44, %s56
      %s448 = ssub.s32 %s45, %s52
      %s449 = sor.u32 %s447, %s448
      %p450 = scmp.eq.s32.totalorder %s449, 0
      %s452 = sadd.s32 %s451, 1
      %s453 = scalar_select %p450, %s451, %s452
      %p456 = pneg %p450
      %p457 = scmp.eq.s32.totalorder %s37, 3
      %p458 = por %p456, %p457
      %p459 = scmp.ne.s32.totalorder %s451, %s454
      %p460 = scmp.eq.s32.totalorder %s37, 0
      %p461 = por %p459, %p460
      %p462 = scmp.ne.s32.totalorder %s451, %s454
      %p463 = scmp.eq.s32.totalorder %s42, 3
      %p464 = por %p462, %p463
      %p465 = scmp.ne.s32.totalorder %s454, %s455
      %p466 = scmp.eq.s32.totalorder %s42, 0
      %p467 = por %p465, %p466
      %p468 = scmp.ne.s32.totalorder %s454, %s455
      %p469 = scmp.eq.s32.totalorder %s43, 3
      %p470 = por %p468, %p469
      %p472 = scmp.ne.s32.totalorder %s455, %s471
      %p473 = scmp.eq.s32.totalorder %s43, 0
      %p474 = por %p472, %p473
      %s475 = ssub.s32 %s44, %s56
      %s476 = ssub.s32 %s45, %s52
      %s477 = sor.u32 %s475, %s476
      %p478 = scmp.eq.s32.totalorder %s477, 0
      %s480 = sadd.s32 %s479, 1
      %s481 = scalar_select %p478, %s479, %s480
      %p484 = pneg %p478
      %p485 = scmp.eq.s32.totalorder %s37, 3
      %p486 = por %p484, %p485
      %p487 = scmp.ne.s32.totalorder %s479, %s482
      %p488 = scmp.eq.s32.totalorder %s37, 0
      %p489 = por %p487, %p488
      %p490 = scmp.ne.s32.totalorder %s479, %s482
      %p491 = scmp.eq.s32.totalorder %s42, 3
      %p492 = por %p490, %p491
      %p493 = scmp.ne.s32.totalorder %s482, %s483
      %p494 = scmp.eq.s32.totalorder %s42, 0
      %p495 = por %p493, %p494
      %p496 = scmp.ne.s32.totalorder %s482, %s483
      %p497 = scmp.eq.s32.totalorder %s43, 3
      %p498 = por %p496, %p497
      %p500 = scmp.ne.s32.totalorder %s483, %s499
      %p501 = scmp.eq.s32.totalorder %s43, 0
      %p502 = por %p500, %p501
      %p503 = scmp.le.s32.totalorder 1, %s37
      %p504 = scmp.lt.s32.totalorder %s37, 5
      %p505 = pnand %p503, %p504
      %p506 = pneg %p505
      // Predicated region
      $region9: #{tpu_custom_call.1} parent=5 // pred_check
        _
      $region10: #{tpu_custom_call.1} parent=5 // pred_check_branch
        %508 = sbr.rel (%p505) target = $region12
      $region11: #{tpu_custom_call.1} parent=5 // pred_region
        %s509 = ssub.s32 %s37, 1
        // Predicated region
        $region13: #{tpu_custom_call.1} parent=11 // pred_check
          %p510 = pneg %p124
        $region14: #{tpu_custom_call.1} parent=11 // pred_check_branch
          %512 = sbr.rel (%p510) target = $region16
        $region15: #{tpu_custom_call.1} parent=11 // pred_region
          _
        $region16: #{tpu_custom_call.1} parent=11 // pred_fallthru
          _
        // Predicated region
        $region17: #{tpu_custom_call.1} parent=11 // pred_check
          %p513 = pneg %p145
        $region18: #{tpu_custom_call.1} parent=11 // pred_check_branch
          %515 = sbr.rel (%p513) target = $region20
        $region19: #{tpu_custom_call.1} parent=11 // pred_region
          _
        $region20: #{tpu_custom_call.1} parent=11 // pred_fallthru
          _
        // Predicated region
        $region21: #{tpu_custom_call.1} parent=11 // pred_check
          %p516 = pneg %p166
        $region22: #{tpu_custom_call.1} parent=11 // pred_check_branch
          %518 = sbr.rel (%p516) target = $region24
        $region23: #{tpu_custom_call.1} parent=11 // pred_region
          %s520 = ssub.s32 256, 256
          %521 = vsyncadd [#allocation9], %s520
          %s522 = sshll.u32 [#allocation8], 4
          %s523 = int_to_ptr.vmem [resolvable:$true] %s522
          %528 = dma.hbm_to_vmem [thread:$0]  %s4, 256, %s523, [#allocation9], 64, 64, 4
        $region24: #{tpu_custom_call.1} parent=11 // pred_fallthru
          _
        // Predicated region
        $region25: #{tpu_custom_call.1} parent=11 // pred_check
          %p529 = pneg %p187
        $region26: #{tpu_custom_call.1} parent=11 // pred_check_branch
          %531 = sbr.rel (%p529) target = $region28
        $region27: #{tpu_custom_call.1} parent=11 // pred_region
          _
        $region28: #{tpu_custom_call.1} parent=11 // pred_fallthru
          _
        // Predicated region
        $region29: #{tpu_custom_call.1} parent=11 // pred_check
          %p532 = pneg %p208
        $region30: #{tpu_custom_call.1} parent=11 // pred_check_branch
          %534 = sbr.rel (%p532) target = $region32
        $region31: #{tpu_custom_call.1} parent=11 // pred_region
          %s536 = ssub.s32 256, 256
          %537 = vsyncadd [#allocation9], %s536
          %s538 = sshll.u32 [#allocation10], 4
          %s539 = int_to_ptr.vmem [resolvable:$true] %s538
          %544 = dma.hbm_to_vmem [thread:$0]  %s6, 256, %s539, [#allocation9], 64, 64, 4
        $region32: #{tpu_custom_call.1} parent=11 // pred_fallthru
          _
        // Predicated region
        $region33: #{tpu_custom_call.1} parent=11 // pred_check
          %p545 = pneg %p229
        $region34: #{tpu_custom_call.1} parent=11 // pred_check_branch
          %547 = sbr.rel (%p545) target = $region36
        $region35: #{tpu_custom_call.1} parent=11 // pred_region
          _
        $region36: #{tpu_custom_call.1} parent=11 // pred_fallthru
          _
        // Predicated region
        $region37: #{tpu_custom_call.1} parent=11 // pred_check
          %p548 = pneg %p250
        $region38: #{tpu_custom_call.1} parent=11 // pred_check_branch
          %550 = sbr.rel (%p548) target = $region40
        $region39: #{tpu_custom_call.1} parent=11 // pred_region
          %s552 = ssub.s32 256, 256
          %553 = vsyncadd [#allocation12], %s552
          %s554 = sshll.u32 [#allocation11], 4
          %s555 = int_to_ptr.vmem [resolvable:$true] %s554
          %560 = dma.hbm_to_vmem [thread:$0]  %s8, 256, %s555, [#allocation12], 64, 64, 4
        $region40: #{tpu_custom_call.1} parent=11 // pred_fallthru
          _
        // Predicated region
        $region41: #{tpu_custom_call.1} parent=11 // pred_check
          %p561 = pneg %p271
        $region42: #{tpu_custom_call.1} parent=11 // pred_check_branch
          %563 = sbr.rel (%p561) target = $region44
        $region43: #{tpu_custom_call.1} parent=11 // pred_region
          _
        $region44: #{tpu_custom_call.1} parent=11 // pred_fallthru
          _
        // Predicated region
        $region45: #{tpu_custom_call.1} parent=11 // pred_check
          %p564 = pneg %p292
        $region46: #{tpu_custom_call.1} parent=11 // pred_check_branch
          %566 = sbr.rel (%p564) target = $region48
        $region47: #{tpu_custom_call.1} parent=11 // pred_region
          _
        $region48: #{tpu_custom_call.1} parent=11 // pred_fallthru
          _
        // Predicated region
        $region49: #{tpu_custom_call.1} parent=11 // pred_check
          %p567 = pneg %p313
        $region50: #{tpu_custom_call.1} parent=11 // pred_check_branch
          %569 = sbr.rel (%p567) target = $region52
        $region51: #{tpu_custom_call.1} parent=11 // pred_region
          _
        $region52: #{tpu_custom_call.1} parent=11 // pred_fallthru
          _
        // Predicated region
        $region53: #{tpu_custom_call.1} parent=11 // pred_check
          %p570 = pneg %p334
        $region54: #{tpu_custom_call.1} parent=11 // pred_check_branch
          %572 = sbr.rel (%p570) target = $region56
        $region55: #{tpu_custom_call.1} parent=11 // pred_region
          %s574 = ssub.s32 256, 256
          %575 = vsyncadd [#allocation12], %s574
          %s576 = sshll.u32 [#allocation13], 4
          %s577 = int_to_ptr.vmem [resolvable:$true] %s576
          %582 = dma.hbm_to_vmem [thread:$0]  %s12, 256, %s577, [#allocation12], 64, 64, 4
        $region56: #{tpu_custom_call.1} parent=11 // pred_fallthru
          _
        // Predicated region
        $region57: #{tpu_custom_call.1} parent=11 // pred_check
          %p583 = pneg %p355
        $region58: #{tpu_custom_call.1} parent=11 // pred_check_branch
          %585 = sbr.rel (%p583) target = $region60
        $region59: #{tpu_custom_call.1} parent=11 // pred_region
          _
        $region60: #{tpu_custom_call.1} parent=11 // pred_fallthru
          _
        // Predicated region
        $region61: #{tpu_custom_call.1} parent=11 // pred_check
          %p586 = pneg %p376
        $region62: #{tpu_custom_call.1} parent=11 // pred_check_branch
          %588 = sbr.rel (%p586) target = $region64
        $region63: #{tpu_custom_call.1} parent=11 // pred_region
          _
        $region64: #{tpu_custom_call.1} parent=11 // pred_fallthru
          _
        // Predicated region
        $region65: #{tpu_custom_call.1} parent=11 // pred_check
          %p589 = pneg %p397
        $region66: #{tpu_custom_call.1} parent=11 // pred_check_branch
          %591 = sbr.rel (%p589) target = $region68
        $region67: #{tpu_custom_call.1} parent=11 // pred_region
          _
        $region68: #{tpu_custom_call.1} parent=11 // pred_fallthru
          _
        // Predicated region
        $region69: #{tpu_custom_call.1} parent=11 // pred_check
          %p592 = pneg %p418
        $region70: #{tpu_custom_call.1} parent=11 // pred_check_branch
          %594 = sbr.rel (%p592) target = $region72
        $region71: #{tpu_custom_call.1} parent=11 // pred_region
          _
        $region72: #{tpu_custom_call.1} parent=11 // pred_fallthru
          _
        // Predicated region
        $region73: #{tpu_custom_call.1} parent=11 // pred_check
          %p595 = pneg %p439
        $region74: #{tpu_custom_call.1} parent=11 // pred_check_branch
          %597 = sbr.rel (%p595) target = $region76
        $region75: #{tpu_custom_call.1} parent=11 // pred_region
          _
        $region76: #{tpu_custom_call.1} parent=11 // pred_fallthru
          _
      $region12: #{tpu_custom_call.1} parent=5 // pred_fallthru
        _
      %p598 = scmp.lt.s32.totalorder %s37, 4
      // Predicated region
      $region77: #{tpu_custom_call.1} parent=5 // pred_check
        %p599 = pneg %p598
      $region78: #{tpu_custom_call.1} parent=5 // pred_check_branch
        %601 = sbr.rel (%p599) target = $region80
      $region79: #{tpu_custom_call.1} parent=5 // pred_region
        // Predicated region
        $region81: #{tpu_custom_call.1} parent=79 // pred_check
          %p602 = pneg %p69
        $region82: #{tpu_custom_call.1} parent=79 // pred_check_branch
          %604 = sbr.rel (%p602) target = $region84
        $region83: #{tpu_custom_call.1} parent=79 // pred_region
          %p605 = scmp.lt.s32.totalorder %s44, 1
          %s606 = scalar_select %p605, %s44, 1
          %s607 = smul.addr %s606, 2
          %s608 = smul.addr %s607, 8
          %s609 = scalar_lea.vmem %s0, %s608
        $region84: #{tpu_custom_call.1} parent=79 // pred_fallthru
          _
        // Predicated region
        $region85: #{tpu_custom_call.1} parent=79 // pred_check
          %p610 = pneg %p97
        $region86: #{tpu_custom_call.1} parent=79 // pred_check_branch
          %612 = sbr.rel (%p610) target = $region88
        $region87: #{tpu_custom_call.1} parent=79 // pred_region
          %s613 = sand.u32 %s87, 1
          %s614 = scalar_lea.sflag [#allocation6], %s613
          %s615 = sand.u32 %s87, 1
          %s616 = smul.addr %s615, 8
          %s617 = scalar_lea.vmem [#allocation5], %s616
          %s619 = ssub.s32 128, 128
          %620 = vsyncadd %s614, %s619
          %s621 = smul.addr %s44, 2
          %s622 = sadd.s32 %s45, %s621
          %s623 = smul.addr %s622, 128
          %s624 = scalar_lea.hbm %s1, %s623
          %s626 = sshll.u32 %s617, 4
          %s627 = int_to_ptr.vmem [resolvable:$true] %s626
          %629 = dma.hbm_to_vmem [thread:$0]  %s624, 128, %s627, %s614
        $region88: #{tpu_custom_call.1} parent=79 // pred_fallthru
          _
      $region80: #{tpu_custom_call.1} parent=5 // pred_fallthru
        _
      %p630 = scmp.le.s32.totalorder 1, %s37
      %p631 = scmp.lt.s32.totalorder %s37, 5
      %p632 = pnand %p630, %p631
      %p633 = pneg %p632
      // Predicated region
      $region89: #{tpu_custom_call.1} parent=5 // pred_check
        _
      $region90: #{tpu_custom_call.1} parent=5 // pred_check_branch
        %635 = sbr.rel (%p632) target = $region92
      $region91: #{tpu_custom_call.1} parent=5 // pred_region
        %s636 = ssub.s32 %s37, 1
        %s637 = sand.u32 %s90, 1
        %s638 = scalar_lea.sflag [#allocation6], %s637
        %s639 = sand.u32 %s90, 1
        %s640 = smul.addr %s639, 8
        %s641 = scalar_lea.vmem [#allocation5], %s640
        // Predicated region
        $region93: #{tpu_custom_call.1} parent=91 // pred_check
          %p642 = pneg %p103
        $region94: #{tpu_custom_call.1} parent=91 // pred_check_branch
          %644 = sbr.rel (%p642) target = $region96
        $region95: #{tpu_custom_call.1} parent=91 // pred_region
          %645 = dma.done %s638, 128
        $region96: #{tpu_custom_call.1} parent=91 // pred_fallthru
          _
        // Predicated region
        $region97: #{tpu_custom_call.1} parent=91 // pred_check
          %p646 = pneg %p166
        $region98: #{tpu_custom_call.1} parent=91 // pred_check_branch
          %648 = sbr.rel (%p646) target = $region100
        $region99: #{tpu_custom_call.1} parent=91 // pred_region
          %649 = dma.done [#allocation9], 256
        $region100: #{tpu_custom_call.1} parent=91 // pred_fallthru
          _
        // Predicated region
        $region101: #{tpu_custom_call.1} parent=91 // pred_check
          %p650 = pneg %p208
        $region102: #{tpu_custom_call.1} parent=91 // pred_check_branch
          %652 = sbr.rel (%p650) target = $region104
        $region103: #{tpu_custom_call.1} parent=91 // pred_region
          %653 = dma.done [#allocation9], 256
        $region104: #{tpu_custom_call.1} parent=91 // pred_fallthru
          _
        // Predicated region
        $region105: #{tpu_custom_call.1} parent=91 // pred_check
          %p654 = pneg %p250
        $region106: #{tpu_custom_call.1} parent=91 // pred_check_branch
          %656 = sbr.rel (%p654) target = $region108
        $region107: #{tpu_custom_call.1} parent=91 // pred_region
          %657 = dma.done [#allocation12], 256
        $region108: #{tpu_custom_call.1} parent=91 // pred_fallthru
          _
        // Predicated region
        $region109: #{tpu_custom_call.1} parent=91 // pred_check
          %p658 = pneg %p334
        $region110: #{tpu_custom_call.1} parent=91 // pred_check_branch
          %660 = sbr.rel (%p658) target = $region112
        $region111: #{tpu_custom_call.1} parent=91 // pred_region
          %661 = dma.done [#allocation12], 256
        $region112: #{tpu_custom_call.1} parent=91 // pred_fallthru
          _
        %p662 = scmp.lt.s32.totalorder %s46, 1
        %s663 = scalar_select %p662, %s46, 1
        %s664 = smul.addr %s663, 2
        %s665 = smul.addr %s664, 8
        %s666 = scalar_lea.vmem %s0, %s665
        %p667 = pneg %p75
        %p668 = pneg %p72
        %s669 = sand.u32 %s90, 1
        %s670 = scalar_lea.sflag [#allocation6], %s669
        %s671 = sand.u32 %s90, 1
        %s672 = smul.addr %s671, 8
        %s673 = scalar_lea.vmem [#allocation5], %s672
        %p674 = pneg %p103
        %p675 = pneg %p100
        %p676 = pneg %p124
        %p677 = pneg %p121
        %p678 = pneg %p145
        %p679 = pneg %p142
        %p680 = pneg %p166
        %p681 = pneg %p163
        %p682 = pneg %p187
        %p683 = pneg %p184
        %p684 = pneg %p208
        %p685 = pneg %p205
        %p686 = pneg %p229
        %p687 = pneg %p226
        %p688 = pneg %p250
        %p689 = pneg %p247
        %p690 = pneg %p271
        %p691 = pneg %p268
        %p692 = pneg %p292
        %p693 = pneg %p289
        %p694 = pneg %p313
        %p695 = pneg %p310
        %p696 = pneg %p334
        %p697 = pneg %p331
        %p698 = pneg %p355
        %p699 = pneg %p352
        %p700 = pneg %p376
        %p701 = pneg %p373
        %p702 = pneg %p397
        %p703 = pneg %p394
        %p704 = pneg %p418
        %p705 = pneg %p415
        %p706 = pneg %p439
        %p707 = pneg %p436
        %p708 = pneg %p467
        %p709 = pneg %p464
        %s710 = sand.u32 %s454, 1
        %s711 = scalar_lea.sflag [#allocation7], %s710
        %s712 = sand.u32 %s454, 1
        %s713 = smul.addr %s712, 8
        %s714 = scalar_lea.vmem [#allocation14], %s713
        %p715 = pneg %p495
        %p716 = pneg %p492
        %s717 = sand.u32 %s482, 1
        %s718 = scalar_lea.sflag [#allocation16], %s717
        %s719 = sand.u32 %s482, 1
        %s720 = smul.addr %s719, 16
        %s721 = scalar_lea.vmem [#allocation15], %s720
        %p722 = scmp.lt.s32.totalorder %s46, 1
        %s723 = scalar_select %p722, %s46, 1
        %s724 = smul.addr %s723, 2
        %s725 = smul.addr %s724, 8
        %s726 = scalar_lea.vmem %s0, %s725
        %p728 = scmp.eq.s32.totalorder %s47, 0
        // Predicated region
        $region113: #{tpu_custom_call.1} parent=91 // pred_check
          %p729 = pneg %p728
        $region114: #{tpu_custom_call.1} parent=91 // pred_check_branch
          %731 = sbr.rel (%p729) target = $region116
        $region115: #{tpu_custom_call.1} parent=91 // pred_region
          %v732 = vld [vmem:[%s726] sm:$0xff]
          %v733 = vld [vmem:[%s726 + $0x8] sm:$0xff]
          %v734 = vpack.c.bf16 %v733, %v732
          %v735 = vld [vmem:[#allocation8] sm:$0xf]
          %v736 = vld [vmem:[#allocation8 + $0x4] sm:$0xf]
          %v737 = vld [vmem:[#allocation8 + $0x8] sm:$0xf]
          %v738 = vld [vmem:[#allocation8 + $0xc] sm:$0xf]
          %v739 = vld [vmem:[%s5] sm:$0x1]
          %v741 = vlaneseq
          %v742 = vshrl.u32 %v741, 7
          %v743 = vsub.s32 0, %v742
          %v744 = vrot.slane %v739, %v743
          %v750 = vunpack.c.l.b16 %v735
          %v751 = vunpack.c.l.b16 %v736
          %v752 = vunpack.c.l.b16 %v737
          %v753 = vunpack.c.l.b16 %v738
          %v754 = vpack.c.b16 %v751, %v750
          %v755 = vpack.c.b16 %v753, %v752
          %vm758 = vcmask 261120
          %v760 = vsel %vm758, %v734, 0
          %762 = vmatprep.subr.bf16.mxu0 0
          %763 = vmatpush1.bf16.msra.mxu0 0
          %764 = vmatprep.subr.bf16.mxu0 0
          %765 = vmatpush1.bf16.msra.mxu0 0
          %766 = vmatprep.subr.bf16.mxu0 0
          %767 = vmatpush1.bf16.msra.mxu0 0
          %768 = vmatprep.subr.bf16.mxu0 0
          %769 = vmatpush1.bf16.msra.mxu0 0
          %770 = vmatprep.subr.bf16.mxu0 0
          %771 = vmatpush1.bf16.msra.mxu0 0
          %772 = vmatprep.subr.bf16.mxu0 0
          %773 = vmatpush1.bf16.msra.mxu0 0
          %774 = vmatprep.subr.bf16.mxu0 0
          %775 = vmatpush1.bf16.msra.mxu0 %v755
          %776 = vmatprep.subr.bf16.mxu0 0
          %777 = vmatpush1.bf16.msra.mxu0 %v754
          %778 = vmatprep.subr.bf16.mxu0 0
          %779 = vmatpush2.bf16.msra.mxu0 0
          %780 = vmatprep.subr.bf16.mxu0 0
          %781 = vmatpush2.bf16.msra.mxu0 0
          %782 = vmatprep.subr.bf16.mxu0 0
          %783 = vmatpush2.bf16.msra.mxu0 0
          %784 = vmatprep.subr.bf16.mxu0 0
          %785 = vmatpush2.bf16.msra.mxu0 0
          %786 = vmatprep.subr.bf16.mxu0 0
          %787 = vmatpush2.bf16.msra.mxu0 0
          %788 = vmatprep.subr.bf16.mxu0 0
          %789 = vmatpush2.bf16.msra.mxu0 0
          %790 = vmatprep.subr.bf16.mxu0 0
          %791 = vmatpush2.bf16.msra.mxu0 0
          %792 = vmatprep.subr.bf16.mxu0 0
          %793 = vmatpush2.bf16.msra.mxu0 0
          %794 = vmatprep.mubr.bf16.mxu0 0
          %795 = vmatmul.mubr.bf16.gmra.mxu0 %v760
          %v796 = vpop.f32.mrf.mxu0
          %v797 = vadd.f32 %v744, %v796
          %v798 = vpop.f32.mrf.mxu0
          %v799 = vpop.f32.mrf.mxu0
          %v800 = vadd.f32 %v744, %v799
          %v801 = vpop.f32.mrf.mxu0
          %802 = vdwg.mxu0
          %v803 = vld [vmem:[#allocation10] sm:$0xf]
          %v804 = vld [vmem:[#allocation10 + $0x4] sm:$0xf]
          %v805 = vld [vmem:[#allocation10 + $0x8] sm:$0xf]
          %v806 = vld [vmem:[#allocation10 + $0xc] sm:$0xf]
          %v807 = vld [vmem:[%s7] sm:$0x1]
          %v809 = vlaneseq
          %v810 = vshrl.u32 %v809, 7
          %v811 = vsub.s32 0, %v810
          %v812 = vrot.slane %v807, %v811
          %v818 = vunpack.c.l.b16 %v803
          %v819 = vunpack.c.l.b16 %v804
          %v820 = vunpack.c.l.b16 %v805
          %v821 = vunpack.c.l.b16 %v806
          %v822 = vpack.c.b16 %v819, %v818
          %v823 = vpack.c.b16 %v821, %v820
          %826 = vmatprep.subr.bf16.mxu0 0
          %827 = vmatpush1.bf16.msra.mxu0 0
          %828 = vmatprep.subr.bf16.mxu0 0
          %829 = vmatpush1.bf16.msra.mxu0 0
          %830 = vmatprep.subr.bf16.mxu0 0
          %831 = vmatpush1.bf16.msra.mxu0 0
          %832 = vmatprep.subr.bf16.mxu0 0
          %833 = vmatpush1.bf16.msra.mxu0 0
          %834 = vmatprep.subr.bf16.mxu0 0
          %835 = vmatpush1.bf16.msra.mxu0 0
          %836 = vmatprep.subr.bf16.mxu0 0
          %837 = vmatpush1.bf16.msra.mxu0 0
          %838 = vmatprep.subr.bf16.mxu0 0
          %839 = vmatpush1.bf16.msra.mxu0 %v823
          %840 = vmatprep.subr.bf16.mxu0 0
          %841 = vmatpush1.bf16.msra.mxu0 %v822
          %842 = vmatprep.subr.bf16.mxu0 0
          %843 = vmatpush2.bf16.msra.mxu0 0
          %844 = vmatprep.subr.bf16.mxu0 0
          %845 = vmatpush2.bf16.msra.mxu0 0
          %846 = vmatprep.subr.bf16.mxu0 0
          %847 = vmatpush2.bf16.msra.mxu0 0
          %848 = vmatprep.subr.bf16.mxu0 0
          %849 = vmatpush2.bf16.msra.mxu0 0
          %850 = vmatprep.subr.bf16.mxu0 0
          %851 = vmatpush2.bf16.msra.mxu0 0
          %852 = vmatprep.subr.bf16.mxu0 0
          %853 = vmatpush2.bf16.msra.mxu0 0
          %854 = vmatprep.subr.bf16.mxu0 0
          %855 = vmatpush2.bf16.msra.mxu0 0
          %856 = vmatprep.subr.bf16.mxu0 0
          %857 = vmatpush2.bf16.msra.mxu0 0
          %858 = vmatprep.mubr.bf16.mxu0 0
          %859 = vmatmul.mubr.bf16.gmra.mxu0 %v760
          %v860 = vpop.f32.mrf.mxu0
          %v861 = vadd.f32 %v812, %v860
          %v862 = vpop.f32.mrf.mxu0
          %v863 = vpop.f32.mrf.mxu0
          %v864 = vadd.f32 %v812, %v863
          %v865 = vpop.f32.mrf.mxu0
          %866 = vdwg.mxu0
          %v867 = vpack.c.bf16 %v800, %v797
          %v869 = vunpack.c.l.b16 %v867
          %v870 = vunpack.c.h.b16 %v867
          %v871 = vpack.c.b16 %v869, %v869
          %v872 = vpack.c.b16 %v870, %v870
          %vm875 = vcmask 257024
          %876 = vst.msk [vmem:[#allocation2] sm:$0xf] %vm875, %v871
          %877 = vst.msk [vmem:[#allocation2 + $0x4] sm:$0xf] %vm875, %v872
          %v878 = vpack.c.bf16 %v864, %v861
          %v880 = vunpack.c.l.b16 %v878
          %v881 = vunpack.c.h.b16 %v878
          %v882 = vpack.c.b16 %v880, %v880
          %v883 = vpack.c.b16 %v881, %v881
          %886 = vst.msk [vmem:[#allocation3] sm:$0xf] %vm875, %v882
          %887 = vst.msk [vmem:[#allocation3 + $0x4] sm:$0xf] %vm875, %v883
        $region116: #{tpu_custom_call.1} parent=91 // pred_fallthru
          _
        %v888 = vld [vmem:[%s641] sm:$0xff]
        %v889 = vpack.c.bf16 %v888, %v888
        %v890 = vld [vmem:[%s2] sm:$0xf]
        %v891 = vld [vmem:[%s2 + $0x4] sm:$0xf]
        %v892 = vld [vmem:[%s2 + $0x8] sm:$0xf]
        %v893 = vld [vmem:[%s2 + $0xc] sm:$0xf]
        %v894 = vld [vmem:[%s3] sm:$0x1]
        %v896 = vlaneseq
        %v897 = vshrl.u32 %v896, 7
        %v898 = vsub.s32 0, %v897
        %v899 = vrot.slane %v894, %v898
        %v905 = vunpack.c.l.b16 %v890
        %v906 = vunpack.c.l.b16 %v891
        %v907 = vunpack.c.l.b16 %v892
        %v908 = vunpack.c.l.b16 %v893
        %v909 = vpack.c.b16 %v906, %v905
        %v910 = vpack.c.b16 %v908, %v907
        %vm913 = vcmask 261120
        %v915 = vsel %vm913, %v889, 0
        %917 = vmatprep.subr.bf16.mxu0 0
        %918 = vmatpush1.bf16.msra.mxu0 0
        %919 = vmatprep.subr.bf16.mxu0 0
        %920 = vmatpush1.bf16.msra.mxu0 0
        %921 = vmatprep.subr.bf16.mxu0 0
        %922 = vmatpush1.bf16.msra.mxu0 0
        %923 = vmatprep.subr.bf16.mxu0 0
        %924 = vmatpush1.bf16.msra.mxu0 0
        %925 = vmatprep.subr.bf16.mxu0 0
        %926 = vmatpush1.bf16.msra.mxu0 0
        %927 = vmatprep.subr.bf16.mxu0 0
        %928 = vmatpush1.bf16.msra.mxu0 0
        %929 = vmatprep.subr.bf16.mxu0 0
        %930 = vmatpush1.bf16.msra.mxu0 %v910
        %931 = vmatprep.subr.bf16.mxu0 0
        %932 = vmatpush1.bf16.msra.mxu0 %v909
        %933 = vmatprep.subr.bf16.mxu0 0
        %934 = vmatpush2.bf16.msra.mxu0 0
        %935 = vmatprep.subr.bf16.mxu0 0
        %936 = vmatpush2.bf16.msra.mxu0 0
        %937 = vmatprep.subr.bf16.mxu0 0
        %938 = vmatpush2.bf16.msra.mxu0 0
        %939 = vmatprep.subr.bf16.mxu0 0
        %940 = vmatpush2.bf16.msra.mxu0 0
        %941 = vmatprep.subr.bf16.mxu0 0
        %942 = vmatpush2.bf16.msra.mxu0 0
        %943 = vmatprep.subr.bf16.mxu0 0
        %944 = vmatpush2.bf16.msra.mxu0 0
        %945 = vmatprep.subr.bf16.mxu0 0
        %946 = vmatpush2.bf16.msra.mxu0 0
        %947 = vmatprep.subr.bf16.mxu0 0
        %948 = vmatpush2.bf16.msra.mxu0 0
        %949 = vmatprep.mubr.bf16.mxu0 0
        %950 = vmatmul.mubr.bf16.gmra.mxu0 %v915
        %v951 = vpop.f32.mrf.mxu0
        %v952 = vadd.f32 %v899, %v951
        %v953 = vpop.f32.mrf.mxu0
        %v954 = vpop.f32.mrf.mxu0
        %v955 = vpop.f32.mrf.mxu0
        %956 = vdwg.mxu0
        %v957 = vmul.f32 %v952, 0.35355338
        %v958 = vpack.c.bf16 %v957, %v957
        %v959 = vld [vmem:[#allocation2] sm:$0xf]
        %v960 = vld [vmem:[#allocation2 + $0x4] sm:$0xf]
        %v963 = vunpack.c.l.b16 %v959
        %v964 = vunpack.c.l.b16 %v960
        %v965 = vpack.c.b16 %v964, %v963
        %vm966 = vcmask 64512
        %v968 = vsel %vm966, %v958, 0
        %v971 = vsel %vm966, %v965, 0
        %973 = vmatprep.subr.bf16.mxu0 0
        %974 = vmatpush1.bf16.xpose.msra.mxu0 0
        %975 = vmatprep.subr.bf16.mxu0 0
        %976 = vmatpush1.bf16.xpose.msra.mxu0 0
        %977 = vmatprep.subr.bf16.mxu0 0
        %978 = vmatpush1.bf16.xpose.msra.mxu0 0
        %979 = vmatprep.subr.bf16.mxu0 0
        %980 = vmatpush1.bf16.xpose.msra.mxu0 0
        %981 = vmatprep.subr.bf16.mxu0 0
        %982 = vmatpush1.bf16.xpose.msra.mxu0 0
        %983 = vmatprep.subr.bf16.mxu0 0
        %984 = vmatpush1.bf16.xpose.msra.mxu0 0
        %985 = vmatprep.subr.bf16.mxu0 0
        %986 = vmatpush1.bf16.xpose.msra.mxu0 0
        %987 = vmatprep.subr.bf16.mxu0 0
        %988 = vmatpush1.bf16.xpose.msra.mxu0 %v971
        %989 = vmatprep.subr.bf16.mxu0 0
        %990 = vmatpush2.bf16.xpose.msra.mxu0 0
        %991 = vmatprep.subr.bf16.mxu0 0
        %992 = vmatpush2.bf16.xpose.msra.mxu0 0
        %993 = vmatprep.subr.bf16.mxu0 0
        %994 = vmatpush2.bf16.xpose.msra.mxu0 0
        %995 = vmatprep.subr.bf16.mxu0 0
        %996 = vmatpush2.bf16.xpose.msra.mxu0 0
        %997 = vmatprep.subr.bf16.mxu0 0
        %998 = vmatpush2.bf16.xpose.msra.mxu0 0
        %999 = vmatprep.subr.bf16.mxu0 0
        %1000 = vmatpush2.bf16.xpose.msra.mxu0 0
        %1001 = vmatprep.subr.bf16.mxu0 0
        %1002 = vmatpush2.bf16.xpose.msra.mxu0 0
        %1003 = vmatprep.subr.bf16.mxu0 0
        %1004 = vmatpush2.bf16.xpose.msra.mxu0 0
        %1005 = vmatprep.mubr.bf16.mxu0 0
        %1006 = vmatmul.mubr.bf16.gmra.mxu0 %v968
        %v1007 = vpop.f32.mrf.mxu0
        %v1008 = vadd.f32 0.0, %v1007
        %v1009 = vpop.f32.mrf.mxu0
        %v1010 = vpop.f32.mrf.mxu0
        %v1011 = vpop.f32.mrf.mxu0
        %1012 = vdwg.mxu0
        %vm1013 = vcmask 130048
        %v1014 = vsel %vm1013, %v1008, -inf
        %1015 = vmax.xlane.f32.xlu0 %v1014
        %v1016 = vpop.xlane.xlu0 %1015
        %v1017 = vsub.f32 %v1008, %v1016
        %v1018 = vmul.f32 %v1017, 1.442695
        %v1019 = vpow.pop %v1018
        %v1020 = vsel %vm1013, %v1019, 0.0
        %1021 = vadd.xlane.f32.xlu0 %v1020
        %v1022 = vpop.xlane.xlu0 %1021
        %v1023 = vrcp.pop %v1022
        %v1024 = vmul.f32 %v1019, %v1023
        %v1025 = vpack.c.bf16 %v1024, %v1024
        %vm1026 = vcmask 125952
        %1027 = vst.msk [vmem:[%s721] sm:$0xf] %vm1026, %v1025
        %v1028 = vld [vmem:[#allocation3] sm:$0xf]
        %v1029 = vld [vmem:[#allocation3 + $0x4] sm:$0xf]
        %v1032 = vunpack.c.l.b16 %v1028
        %v1033 = vunpack.c.l.b16 %v1029
        %v1034 = vpack.c.b16 %v1033, %v1032
        %v1037 = vsel %vm1013, %v1025, 0
        %1039 = vmatprep.subr.bf16.mxu0 0
        %1040 = vmatpush1.bf16.msra.mxu0 0
        %1041 = vmatprep.subr.bf16.mxu0 0
        %1042 = vmatpush1.bf16.msra.mxu0 0
        %1043 = vmatprep.subr.bf16.mxu0 0
        %1044 = vmatpush1.bf16.msra.mxu0 0
        %1045 = vmatprep.subr.bf16.mxu0 0
        %1046 = vmatpush1.bf16.msra.mxu0 0
        %1047 = vmatprep.subr.bf16.mxu0 0
        %1048 = vmatpush1.bf16.msra.mxu0 0
        %1049 = vmatprep.subr.bf16.mxu0 0
        %1050 = vmatpush1.bf16.msra.mxu0 0
        %1051 = vmatprep.subr.bf16.mxu0 0
        %1052 = vmatpush1.bf16.msra.mxu0 0
        %1053 = vmatprep.subr.bf16.mxu0 0
        %1054 = vmatpush1.bf16.msra.mxu0 %v1034
        %1055 = vmatprep.subr.bf16.mxu0 0
        %1056 = vmatpush2.bf16.msra.mxu0 0
        %1057 = vmatprep.subr.bf16.mxu0 0
        %1058 = vmatpush2.bf16.msra.mxu0 0
        %1059 = vmatprep.subr.bf16.mxu0 0
        %1060 = vmatpush2.bf16.msra.mxu0 0
        %1061 = vmatprep.subr.bf16.mxu0 0
        %1062 = vmatpush2.bf16.msra.mxu0 0
        %1063 = vmatprep.subr.bf16.mxu0 0
        %1064 = vmatpush2.bf16.msra.mxu0 0
        %1065 = vmatprep.subr.bf16.mxu0 0
        %1066 = vmatpush2.bf16.msra.mxu0 0
        %1067 = vmatprep.subr.bf16.mxu0 0
        %1068 = vmatpush2.bf16.msra.mxu0 0
        %1069 = vmatprep.subr.bf16.mxu0 0
        %1070 = vmatpush2.bf16.msra.mxu0 0
        %1071 = vmatprep.mubr.bf16.mxu0 0
        %1072 = vmatmul.mubr.bf16.gmra.mxu0 %v1037
        %v1073 = vpop.f32.mrf.mxu0
        %v1074 = vadd.f32 0.0, %v1073
        %v1075 = vpop.f32.mrf.mxu0
        %v1076 = vpop.f32.mrf.mxu0
        %v1077 = vpop.f32.mrf.mxu0
        %1078 = vdwg.mxu0
        %v1079 = vpack.c.bf16 %v1074, %v1074
        %vm1080 = vcmask 60416
        %1081 = vst.msk [vmem:[#allocation4] sm:$0xf] %vm1080, %v1079
        %v1082 = vld [vmem:[#allocation2] sm:$0xf]
        %v1083 = vld [vmem:[#allocation2 + $0x4] sm:$0xf]
        %1085 = vrot.lane.b32.xlu0 %v958, 120
        %v1086 = vpop.permute.xlu0 %1085
        %v1089 = vunpack.c.l.b16 %v1082
        %v1090 = vunpack.c.l.b16 %v1083
        %v1091 = vpack.c.b16 %v1090, %v1089
        %1092 = vrot.lane.b32.xlu0 %v1091, 120
        %v1093 = vpop.permute.xlu0 %1092
        %v1095 = vsel %vm966, %v1086, 0
        %v1098 = vsel %vm966, %v1093, 0
        %1100 = vmatprep.subr.bf16.mxu0 0
        %1101 = vmatpush1.bf16.xpose.msra.mxu0 0
        %1102 = vmatprep.subr.bf16.mxu0 0
        %1103 = vmatpush1.bf16.xpose.msra.mxu0 0
        %1104 = vmatprep.subr.bf16.mxu0 0
        %1105 = vmatpush1.bf16.xpose.msra.mxu0 0
        %1106 = vmatprep.subr.bf16.mxu0 0
        %1107 = vmatpush1.bf16.xpose.msra.mxu0 0
        %1108 = vmatprep.subr.bf16.mxu0 0
        %1109 = vmatpush1.bf16.xpose.msra.mxu0 0
        %1110 = vmatprep.subr.bf16.mxu0 0
        %1111 = vmatpush1.bf16.xpose.msra.mxu0 0
        %1112 = vmatprep.subr.bf16.mxu0 0
        %1113 = vmatpush1.bf16.xpose.msra.mxu0 0
        %1114 = vmatprep.subr.bf16.mxu0 0
        %1115 = vmatpush1.bf16.xpose.msra.mxu0 %v1098
        %1116 = vmatprep.subr.bf16.mxu0 0
        %1117 = vmatpush2.bf16.xpose.msra.mxu0 0
        %1118 = vmatprep.subr.bf16.mxu0 0
        %1119 = vmatpush2.bf16.xpose.msra.mxu0 0
        %1120 = vmatprep.subr.bf16.mxu0 0
        %1121 = vmatpush2.bf16.xpose.msra.mxu0 0
        %1122 = vmatprep.subr.bf16.mxu0 0
        %1123 = vmatpush2.bf16.xpose.msra.mxu0 0
        %1124 = vmatprep.subr.bf16.mxu0 0
        %1125 = vmatpush2.bf16.xpose.msra.mxu0 0
        %1126 = vmatprep.subr.bf16.mxu0 0
        %1127 = vmatpush2.bf16.xpose.msra.mxu0 0
        %1128 = vmatprep.subr.bf16.mxu0 0
        %1129 = vmatpush2.bf16.xpose.msra.mxu0 0
        %1130 = vmatprep.subr.bf16.mxu0 0
        %1131 = vmatpush2.bf16.xpose.msra.mxu0 0
        %1132 = vmatprep.mubr.bf16.mxu0 0
        %1133 = vmatmul.mubr.bf16.gmra.mxu0 %v1095
        %v1134 = vpop.f32.mrf.mxu0
        %v1135 = vadd.f32 0.0, %v1134
        %v1136 = vpop.f32.mrf.mxu0
        %v1137 = vpop.f32.mrf.mxu0
        %v1138 = vpop.f32.mrf.mxu0
        %1139 = vdwg.mxu0
        %v1140 = vsel %vm1013, %v1135, -inf
        %1141 = vmax.xlane.f32.xlu0 %v1140
        %v1142 = vpop.xlane.xlu0 %1141
        %v1143 = vsub.f32 %v1135, %v1142
        %v1144 = vmul.f32 %v1143, 1.442695
        %v1145 = vpow.pop %v1144
        %v1146 = vsel %vm1013, %v1145, 0.0
        %1147 = vadd.xlane.f32.xlu0 %v1146
        %v1148 = vpop.xlane.xlu0 %1147
        %v1149 = vrcp.pop %v1148
        %v1150 = vmul.f32 %v1145, %v1149
        %v1151 = vpack.c.bf16 %v1150, %v1150
        %s1152 = scalar_lea.vmem %s721, 4 [#allocation15]
        %1153 = vst.msk [vmem:[%s1152] sm:$0xf] %vm1026, %v1151
        %v1154 = vld [vmem:[#allocation3] sm:$0xf]
        %v1155 = vld [vmem:[#allocation3 + $0x4] sm:$0xf]
        %v1158 = vunpack.c.l.b16 %v1154
        %v1159 = vunpack.c.l.b16 %v1155
        %v1160 = vpack.c.b16 %v1159, %v1158
        %1161 = vrot.lane.b32.xlu0 %v1160, 120
        %v1162 = vpop.permute.xlu0 %1161
        %v1165 = vsel %vm1013, %v1151, 0
        %1167 = vmatprep.subr.bf16.mxu0 0
        %1168 = vmatpush1.bf16.msra.mxu0 0
        %1169 = vmatprep.subr.bf16.mxu0 0
        %1170 = vmatpush1.bf16.msra.mxu0 0
        %1171 = vmatprep.subr.bf16.mxu0 0
        %1172 = vmatpush1.bf16.msra.mxu0 0
        %1173 = vmatprep.subr.bf16.mxu0 0
        %1174 = vmatpush1.bf16.msra.mxu0 0
        %1175 = vmatprep.subr.bf16.mxu0 0
        %1176 = vmatpush1.bf16.msra.mxu0 0
        %1177 = vmatprep.subr.bf16.mxu0 0
        %1178 = vmatpush1.bf16.msra.mxu0 0
        %1179 = vmatprep.subr.bf16.mxu0 0
        %1180 = vmatpush1.bf16.msra.mxu0 0
        %1181 = vmatprep.subr.bf16.mxu0 0
        %1182 = vmatpush1.bf16.msra.mxu0 %v1162
        %1183 = vmatprep.subr.bf16.mxu0 0
        %1184 = vmatpush2.bf16.msra.mxu0 0
        %1185 = vmatprep.subr.bf16.mxu0 0
        %1186 = vmatpush2.bf16.msra.mxu0 0
        %1187 = vmatprep.subr.bf16.mxu0 0
        %1188 = vmatpush2.bf16.msra.mxu0 0
        %1189 = vmatprep.subr.bf16.mxu0 0
        %1190 = vmatpush2.bf16.msra.mxu0 0
        %1191 = vmatprep.subr.bf16.mxu0 0
        %1192 = vmatpush2.bf16.msra.mxu0 0
        %1193 = vmatprep.subr.bf16.mxu0 0
        %1194 = vmatpush2.bf16.msra.mxu0 0
        %1195 = vmatprep.subr.bf16.mxu0 0
        %1196 = vmatpush2.bf16.msra.mxu0 0
        %1197 = vmatprep.subr.bf16.mxu0 0
        %1198 = vmatpush2.bf16.msra.mxu0 0
        %1199 = vmatprep.mubr.bf16.mxu0 0
        %1200 = vmatmul.mubr.bf16.gmra.mxu0 %v1165
        %v1201 = vpop.f32.mrf.mxu0
        %v1202 = vadd.f32 0.0, %v1201
        %v1203 = vpop.f32.mrf.mxu0
        %v1204 = vpop.f32.mrf.mxu0
        %v1205 = vpop.f32.mrf.mxu0
        %1206 = vdwg.mxu0
        %v1207 = vpack.c.bf16 %v1202, %v1202
        %v1209 = vunpack.c.l.b16 %v1207
        %v1210 = vpack.c.b16 %v1209, %v1209
        %1211 = vrot.lane.b32.xlu0 %v1210, 8
        %v1212 = vpop.permute.xlu0 %1211
        %vm1214 = vcmask 126016
        %1215 = vst.msk [vmem:[#allocation4] sm:$0xf] %vm1214, %v1212
        %v1216 = vld [vmem:[#allocation2] sm:$0xf]
        %v1217 = vld [vmem:[#allocation2 + $0x4] sm:$0xf]
        %1218 = vrot.lane.b32.xlu0 %v958, 112
        %v1219 = vpop.permute.xlu0 %1218
        %v1222 = vunpack.c.l.b16 %v1216
        %v1223 = vunpack.c.l.b16 %v1217
        %v1224 = vpack.c.b16 %v1223, %v1222
        %1225 = vrot.lane.b32.xlu0 %v1224, 112
        %v1226 = vpop.permute.xlu0 %1225
        %v1228 = vsel %vm966, %v1219, 0
        %v1231 = vsel %vm966, %v1226, 0
        %1233 = vmatprep.subr.bf16.mxu0 0
        %1234 = vmatpush1.bf16.xpose.msra.mxu0 0
        %1235 = vmatprep.subr.bf16.mxu0 0
        %1236 = vmatpush1.bf16.xpose.msra.mxu0 0
        %1237 = vmatprep.subr.bf16.mxu0 0
        %1238 = vmatpush1.bf16.xpose.msra.mxu0 0
        %1239 = vmatprep.subr.bf16.mxu0 0
        %1240 = vmatpush1.bf16.xpose.msra.mxu0 0
        %1241 = vmatprep.subr.bf16.mxu0 0
        %1242 = vmatpush1.bf16.xpose.msra.mxu0 0
        %1243 = vmatprep.subr.bf16.mxu0 0
        %1244 = vmatpush1.bf16.xpose.msra.mxu0 0
        %1245 = vmatprep.subr.bf16.mxu0 0
        %1246 = vmatpush1.bf16.xpose.msra.mxu0 0
        %1247 = vmatprep.subr.bf16.mxu0 0
        %1248 = vmatpush1.bf16.xpose.msra.mxu0 %v1231
        %1249 = vmatprep.subr.bf16.mxu0 0
        %1250 = vmatpush2.bf16.xpose.msra.mxu0 0
        %1251 = vmatprep.subr.bf16.mxu0 0
        %1252 = vmatpush2.bf16.xpose.msra.mxu0 0
        %1253 = vmatprep.subr.bf16.mxu0 0
        %1254 = vmatpush2.bf16.xpose.msra.mxu0 0
        %1255 = vmatprep.subr.bf16.mxu0 0
        %1256 = vmatpush2.bf16.xpose.msra.mxu0 0
        %1257 = vmatprep.subr.bf16.mxu0 0
        %1258 = vmatpush2.bf16.xpose.msra.mxu0 0
        %1259 = vmatprep.subr.bf16.mxu0 0
        %1260 = vmatpush2.bf16.xpose.msra.mxu0 0
        %1261 = vmatprep.subr.bf16.mxu0 0
        %1262 = vmatpush2.bf16.xpose.msra.mxu0 0
        %1263 = vmatprep.subr.bf16.mxu0 0
        %1264 = vmatpush2.bf16.xpose.msra.mxu0 0
        %1265 = vmatprep.mubr.bf16.mxu0 0
        %1266 = vmatmul.mubr.bf16.gmra.mxu0 %v1228
        %v1267 = vpop.f32.mrf.mxu0
        %v1268 = vadd.f32 0.0, %v1267
        %v1269 = vpop.f32.mrf.mxu0
        %v1270 = vpop.f32.mrf.mxu0
        %v1271 = vpop.f32.mrf.mxu0
        %1272 = vdwg.mxu0
        %v1273 = vsel %vm1013, %v1268, -inf
        %1274 = vmax.xlane.f32.xlu0 %v1273
        %v1275 = vpop.xlane.xlu0 %1274
        %v1276 = vsub.f32 %v1268, %v1275
        %v1277 = vmul.f32 %v1276, 1.442695
        %v1278 = vpow.pop %v1277
        %v1279 = vsel %vm1013, %v1278, 0.0
        %1280 = vadd.xlane.f32.xlu0 %v1279
        %v1281 = vpop.xlane.xlu0 %1280
        %v1282 = vrcp.pop %v1281
        %v1283 = vmul.f32 %v1278, %v1282
        %v1284 = vpack.c.bf16 %v1283, %v1283
        %s1285 = scalar_lea.vmem %s721, 8 [#allocation15]
        %1286 = vst.msk [vmem:[%s1285] sm:$0xf] %vm1026, %v1284
        %v1287 = vld [vmem:[#allocation3] sm:$0xf]
        %v1288 = vld [vmem:[#allocation3 + $0x4] sm:$0xf]
        %v1291 = vunpack.c.l.b16 %v1287
        %v1292 = vunpack.c.l.b16 %v1288
        %v1293 = vpack.c.b16 %v1292, %v1291
        %1294 = vrot.lane.b32.xlu0 %v1293, 112
        %v1295 = vpop.permute.xlu0 %1294
        %v1298 = vsel %vm1013, %v1284, 0
        %1300 = vmatprep.subr.bf16.mxu0 0
        %1301 = vmatpush1.bf16.msra.mxu0 0
        %1302 = vmatprep.subr.bf16.mxu0 0
        %1303 = vmatpush1.bf16.msra.mxu0 0
        %1304 = vmatprep.subr.bf16.mxu0 0
        %1305 = vmatpush1.bf16.msra.mxu0 0
        %1306 = vmatprep.subr.bf16.mxu0 0
        %1307 = vmatpush1.bf16.msra.mxu0 0
        %1308 = vmatprep.subr.bf16.mxu0 0
        %1309 = vmatpush1.bf16.msra.mxu0 0
        %1310 = vmatprep.subr.bf16.mxu0 0
        %1311 = vmatpush1.bf16.msra.mxu0 0
        %1312 = vmatprep.subr.bf16.mxu0 0
        %1313 = vmatpush1.bf16.msra.mxu0 0
        %1314 = vmatprep.subr.bf16.mxu0 0
        %1315 = vmatpush1.bf16.msra.mxu0 %v1295
        %1316 = vmatprep.subr.bf16.mxu0 0
        %1317 = vmatpush2.bf16.msra.mxu0 0
        %1318 = vmatprep.subr.bf16.mxu0 0
        %1319 = vmatpush2.bf16.msra.mxu0 0
        %1320 = vmatprep.subr.bf16.mxu0 0
        %1321 = vmatpush2.bf16.msra.mxu0 0
        %1322 = vmatprep.subr.bf16.mxu0 0
        %1323 = vmatpush2.bf16.msra.mxu0 0
        %1324 = vmatprep.subr.bf16.mxu0 0
        %1325 = vmatpush2.bf16.msra.mxu0 0
        %1326 = vmatprep.subr.bf16.mxu0 0
        %1327 = vmatpush2.bf16.msra.mxu0 0
        %1328 = vmatprep.subr.bf16.mxu0 0
        %1329 = vmatpush2.bf16.msra.mxu0 0
        %1330 = vmatprep.subr.bf16.mxu0 0
        %1331 = vmatpush2.bf16.msra.mxu0 0
        %1332 = vmatprep.mubr.bf16.mxu0 0
        %1333 = vmatmul.mubr.bf16.gmra.mxu0 %v1298
        %v1334 = vpop.f32.mrf.mxu0
        %v1335 = vadd.f32 0.0, %v1334
        %v1336 = vpop.f32.mrf.mxu0
        %v1337 = vpop.f32.mrf.mxu0
        %v1338 = vpop.f32.mrf.mxu0
        %1339 = vdwg.mxu0
        %v1340 = vpack.c.bf16 %v1335, %v1335
        %v1342 = vunpack.c.l.b16 %v1340
        %v1343 = vpack.c.b16 %v1342, %v1342
        %1344 = vrot.lane.b32.xlu0 %v1343, 16
        %v1345 = vpop.permute.xlu0 %1344
        %vm1347 = vcmask 191616
        %1348 = vst.msk [vmem:[#allocation4] sm:$0xf] %vm1347, %v1345
        %v1349 = vld [vmem:[#allocation2] sm:$0xf]
        %v1350 = vld [vmem:[#allocation2 + $0x4] sm:$0xf]
        %1351 = vrot.lane.b32.xlu0 %v958, 104
        %v1352 = vpop.permute.xlu0 %1351
        %v1355 = vunpack.c.l.b16 %v1349
        %v1356 = vunpack.c.l.b16 %v1350
        %v1357 = vpack.c.b16 %v1356, %v1355
        %1358 = vrot.lane.b32.xlu0 %v1357, 104
        %v1359 = vpop.permute.xlu0 %1358
        %v1361 = vsel %vm966, %v1352, 0
        %v1364 = vsel %vm966, %v1359, 0
        %1366 = vmatprep.subr.bf16.mxu0 0
        %1367 = vmatpush1.bf16.xpose.msra.mxu0 0
        %1368 = vmatprep.subr.bf16.mxu0 0
        %1369 = vmatpush1.bf16.xpose.msra.mxu0 0
        %1370 = vmatprep.subr.bf16.mxu0 0
        %1371 = vmatpush1.bf16.xpose.msra.mxu0 0
        %1372 = vmatprep.subr.bf16.mxu0 0
        %1373 = vmatpush1.bf16.xpose.msra.mxu0 0
        %1374 = vmatprep.subr.bf16.mxu0 0
        %1375 = vmatpush1.bf16.xpose.msra.mxu0 0
        %1376 = vmatprep.subr.bf16.mxu0 0
        %1377 = vmatpush1.bf16.xpose.msra.mxu0 0
        %1378 = vmatprep.subr.bf16.mxu0 0
        %1379 = vmatpush1.bf16.xpose.msra.mxu0 0
        %1380 = vmatprep.subr.bf16.mxu0 0
        %1381 = vmatpush1.bf16.xpose.msra.mxu0 %v1364
        %1382 = vmatprep.subr.bf16.mxu0 0
        %1383 = vmatpush2.bf16.xpose.msra.mxu0 0
        %1384 = vmatprep.subr.bf16.mxu0 0
        %1385 = vmatpush2.bf16.xpose.msra.mxu0 0
        %1386 = vmatprep.subr.bf16.mxu0 0
        %1387 = vmatpush2.bf16.xpose.msra.mxu0 0
        %1388 = vmatprep.subr.bf16.mxu0 0
        %1389 = vmatpush2.bf16.xpose.msra.mxu0 0
        %1390 = vmatprep.subr.bf16.mxu0 0
        %1391 = vmatpush2.bf16.xpose.msra.mxu0 0
        %1392 = vmatprep.subr.bf16.mxu0 0
        %1393 = vmatpush2.bf16.xpose.msra.mxu0 0
        %1394 = vmatprep.subr.bf16.mxu0 0
        %1395 = vmatpush2.bf16.xpose.msra.mxu0 0
        %1396 = vmatprep.subr.bf16.mxu0 0
        %1397 = vmatpush2.bf16.xpose.msra.mxu0 0
        %1398 = vmatprep.mubr.bf16.mxu0 0
        %1399 = vmatmul.mubr.bf16.gmra.mxu0 %v1361
        %v1400 = vpop.f32.mrf.mxu0
        %v1401 = vadd.f32 0.0, %v1400
        %v1402 = vpop.f32.mrf.mxu0
        %v1403 = vpop.f32.mrf.mxu0
        %v1404 = vpop.f32.mrf.mxu0
        %1405 = vdwg.mxu0
        %v1406 = vsel %vm1013, %v1401, -inf
        %1407 = vmax.xlane.f32.xlu0 %v1406
        %v1408 = vpop.xlane.xlu0 %1407
        %v1409 = vsub.f32 %v1401, %v1408
        %v1410 = vmul.f32 %v1409, 1.442695
        %v1411 = vpow.pop %v1410
        %v1412 = vsel %vm1013, %v1411, 0.0
        %1413 = vadd.xlane.f32.xlu0 %v1412
        %v1414 = vpop.xlane.xlu0 %1413
        %v1415 = vrcp.pop %v1414
        %v1416 = vmul.f32 %v1411, %v1415
        %v1417 = vpack.c.bf16 %v1416, %v1416
        %s1418 = scalar_lea.vmem %s721, 12 [#allocation15]
        %1419 = vst.msk [vmem:[%s1418] sm:$0xf] %vm1026, %v1417
        %v1420 = vld [vmem:[#allocation3] sm:$0xf]
        %v1421 = vld [vmem:[#allocation3 + $0x4] sm:$0xf]
        %v1424 = vunpack.c.l.b16 %v1420
        %v1425 = vunpack.c.l.b16 %v1421
        %v1426 = vpack.c.b16 %v1425, %v1424
        %1427 = vrot.lane.b32.xlu0 %v1426, 104
        %v1428 = vpop.permute.xlu0 %1427
        %v1431 = vsel %vm1013, %v1417, 0
        %1433 = vmatprep.subr.bf16.mxu0 0
        %1434 = vmatpush1.bf16.msra.mxu0 0
        %1435 = vmatprep.subr.bf16.mxu0 0
        %1436 = vmatpush1.bf16.msra.mxu0 0
        %1437 = vmatprep.subr.bf16.mxu0 0
        %1438 = vmatpush1.bf16.msra.mxu0 0
        %1439 = vmatprep.subr.bf16.mxu0 0
        %1440 = vmatpush1.bf16.msra.mxu0 0
        %1441 = vmatprep.subr.bf16.mxu0 0
        %1442 = vmatpush1.bf16.msra.mxu0 0
        %1443 = vmatprep.subr.bf16.mxu0 0
        %1444 = vmatpush1.bf16.msra.mxu0 0
        %1445 = vmatprep.subr.bf16.mxu0 0
        %1446 = vmatpush1.bf16.msra.mxu0 0
        %1447 = vmatprep.subr.bf16.mxu0 0
        %1448 = vmatpush1.bf16.msra.mxu0 %v1428
        %1449 = vmatprep.subr.bf16.mxu0 0
        %1450 = vmatpush2.bf16.msra.mxu0 0
        %1451 = vmatprep.subr.bf16.mxu0 0
        %1452 = vmatpush2.bf16.msra.mxu0 0
        %1453 = vmatprep.subr.bf16.mxu0 0
        %1454 = vmatpush2.bf16.msra.mxu0 0
        %1455 = vmatprep.subr.bf16.mxu0 0
        %1456 = vmatpush2.bf16.msra.mxu0 0
        %1457 = vmatprep.subr.bf16.mxu0 0
        %1458 = vmatpush2.bf16.msra.mxu0 0
        %1459 = vmatprep.subr.bf16.mxu0 0
        %1460 = vmatpush2.bf16.msra.mxu0 0
        %1461 = vmatprep.subr.bf16.mxu0 0
        %1462 = vmatpush2.bf16.msra.mxu0 0
        %1463 = vmatprep.subr.bf16.mxu0 0
        %1464 = vmatpush2.bf16.msra.mxu0 0
        %1465 = vmatprep.mubr.bf16.mxu0 0
        %1466 = vmatmul.mubr.bf16.gmra.mxu0 %v1431
        %v1467 = vpop.f32.mrf.mxu0
        %v1468 = vadd.f32 0.0, %v1467
        %v1469 = vpop.f32.mrf.mxu0
        %v1470 = vpop.f32.mrf.mxu0
        %v1471 = vpop.f32.mrf.mxu0
        %1472 = vdwg.mxu0
        %v1473 = vpack.c.bf16 %v1468, %v1468
        %v1475 = vunpack.c.l.b16 %v1473
        %v1476 = vpack.c.b16 %v1475, %v1475
        %1477 = vrot.lane.b32.xlu0 %v1476, 24
        %v1478 = vpop.permute.xlu0 %1477
        %vm1480 = vcmask 257216
        %1481 = vst.msk [vmem:[#allocation4] sm:$0xf] %vm1480, %v1478
        %v1482 = vld [vmem:[#allocation4] sm:$0xf]
        %v1483 = vld [vmem:[#allocation11] sm:$0xf]
        %v1484 = vld [vmem:[#allocation11 + $0x4] sm:$0xf]
        %v1485 = vld [vmem:[#allocation11 + $0x8] sm:$0xf]
        %v1486 = vld [vmem:[#allocation11 + $0xc] sm:$0xf]
        %v1487 = vld [vmem:[%s9] sm:$0x1]
        %v1489 = vlaneseq
        %v1490 = vshrl.u32 %v1489, 7
        %v1491 = vsub.s32 0, %v1490
        %v1492 = vrot.slane %v1487, %v1491
        %v1498 = vunpack.c.l.b16 %v1483
        %v1499 = vunpack.c.l.b16 %v1484
        %v1500 = vunpack.c.l.b16 %v1485
        %v1501 = vunpack.c.l.b16 %v1486
        %v1502 = vpack.c.b16 %v1499, %v1498
        %v1503 = vpack.c.b16 %v1501, %v1500
        %v1507 = vsel %vm913, %v1482, 0
        %1509 = vmatprep.subr.bf16.mxu0 0
        %1510 = vmatpush1.bf16.msra.mxu0 0
        %1511 = vmatprep.subr.bf16.mxu0 0
        %1512 = vmatpush1.bf16.msra.mxu0 0
        %1513 = vmatprep.subr.bf16.mxu0 0
        %1514 = vmatpush1.bf16.msra.mxu0 0
        %1515 = vmatprep.subr.bf16.mxu0 0
        %1516 = vmatpush1.bf16.msra.mxu0 0
        %1517 = vmatprep.subr.bf16.mxu0 0
        %1518 = vmatpush1.bf16.msra.mxu0 0
        %1519 = vmatprep.subr.bf16.mxu0 0
        %1520 = vmatpush1.bf16.msra.mxu0 0
        %1521 = vmatprep.subr.bf16.mxu0 0
        %1522 = vmatpush1.bf16.msra.mxu0 %v1503
        %1523 = vmatprep.subr.bf16.mxu0 0
        %1524 = vmatpush1.bf16.msra.mxu0 %v1502
        %1525 = vmatprep.subr.bf16.mxu0 0
        %1526 = vmatpush2.bf16.msra.mxu0 0
        %1527 = vmatprep.subr.bf16.mxu0 0
        %1528 = vmatpush2.bf16.msra.mxu0 0
        %1529 = vmatprep.subr.bf16.mxu0 0
        %1530 = vmatpush2.bf16.msra.mxu0 0
        %1531 = vmatprep.subr.bf16.mxu0 0
        %1532 = vmatpush2.bf16.msra.mxu0 0
        %1533 = vmatprep.subr.bf16.mxu0 0
        %1534 = vmatpush2.bf16.msra.mxu0 0
        %1535 = vmatprep.subr.bf16.mxu0 0
        %1536 = vmatpush2.bf16.msra.mxu0 0
        %1537 = vmatprep.subr.bf16.mxu0 0
        %1538 = vmatpush2.bf16.msra.mxu0 0
        %1539 = vmatprep.subr.bf16.mxu0 0
        %1540 = vmatpush2.bf16.msra.mxu0 0
        %1541 = vmatprep.mubr.bf16.mxu0 0
        %1542 = vmatmul.mubr.bf16.gmra.mxu0 %v1507
        %v1543 = vpop.f32.mrf.mxu0
        %v1544 = vadd.f32 %v1492, %v1543
        %v1545 = vpop.f32.mrf.mxu0
        %v1546 = vpop.f32.mrf.mxu0
        %v1547 = vpop.f32.mrf.mxu0
        %1548 = vdwg.mxu0
        %v1549 = vadd.f32 %v1544, %v888
        %v1550 = vld [vmem:[%s10] sm:$0x1]
        %v1551 = vld [vmem:[%s11] sm:$0x1]
        %v1552 = vsel %vm913, %v1549, 0.0
        %1553 = vadd.xlane.f32.xlu0 %v1552
        %v1554 = vpop.xlane.xlu0 %1553
        %v1555 = vrcp.pop 32.0
        %v1556 = vmul.f32 %v1554, %v1555
        %v1557 = vsub.f32 %v1549, %v1556
        %v1558 = vmul.f32 %v1557, %v1557
        %v1559 = vsel %vm913, %v1558, 0.0
        %1560 = vadd.xlane.f32.xlu0 %v1559
        %v1561 = vpop.xlane.xlu0 %1560
        %v1562 = vmul.f32 %v1561, %v1555
        %v1563 = vadd.f32 %v1562, 1e-06
        %v1564 = vrsqrt.pop %v1563
        %v1565 = vmul.f32 %v1557, %v1564
        %v1567 = vlaneseq
        %v1568 = vshrl.u32 %v1567, 7
        %v1569 = vsub.s32 0, %v1568
        %v1570 = vrot.slane %v1550, %v1569
        %v1572 = vmul.f32 %v1565, %v1570
        %v1574 = vlaneseq
        %v1575 = vshrl.u32 %v1574, 7
        %v1576 = vsub.s32 0, %v1575
        %v1577 = vrot.slane %v1551, %v1576
        %v1579 = vadd.f32 %v1572, %v1577
        %v1580 = vpack.c.bf16 %v1579, %v1579
        %v1581 = vld [vmem:[#allocation13] sm:$0xf]
        %v1582 = vld [vmem:[#allocation13 + $0x4] sm:$0xf]
        %v1583 = vld [vmem:[#allocation13 + $0x8] sm:$0xf]
        %v1584 = vld [vmem:[#allocation13 + $0xc] sm:$0xf]
        %v1585 = vld [vmem:[%s13] sm:$0x1]
        %v1587 = vlaneseq
        %v1588 = vshrl.u32 %v1587, 7
        %v1589 = vsub.s32 0, %v1588
        %v1590 = vrot.slane %v1585, %v1589
        %v1596 = vunpack.c.l.b16 %v1581
        %v1597 = vunpack.c.l.b16 %v1582
        %v1598 = vunpack.c.l.b16 %v1583
        %v1599 = vunpack.c.l.b16 %v1584
        %v1600 = vpack.c.b16 %v1597, %v1596
        %v1601 = vpack.c.b16 %v1599, %v1598
        %v1605 = vsel %vm913, %v1580, 0
        %1607 = vmatprep.subr.bf16.mxu0 0
        %1608 = vmatpush1.bf16.msra.mxu0 0
        %1609 = vmatprep.subr.bf16.mxu0 0
        %1610 = vmatpush1.bf16.msra.mxu0 0
        %1611 = vmatprep.subr.bf16.mxu0 0
        %1612 = vmatpush1.bf16.msra.mxu0 0
        %1613 = vmatprep.subr.bf16.mxu0 0
        %1614 = vmatpush1.bf16.msra.mxu0 0
        %1615 = vmatprep.subr.bf16.mxu0 0
        %1616 = vmatpush1.bf16.msra.mxu0 0
        %1617 = vmatprep.subr.bf16.mxu0 0
        %1618 = vmatpush1.bf16.msra.mxu0 0
        %1619 = vmatprep.subr.bf16.mxu0 0
        %1620 = vmatpush1.bf16.msra.mxu0 %v1601
        %1621 = vmatprep.subr.bf16.mxu0 0
        %1622 = vmatpush1.bf16.msra.mxu0 %v1600
        %1623 = vmatprep.subr.bf16.mxu0 0
        %1624 = vmatpush2.bf16.msra.mxu0 0
        %1625 = vmatprep.subr.bf16.mxu0 0
        %1626 = vmatpush2.bf16.msra.mxu0 0
        %1627 = vmatprep.subr.bf16.mxu0 0
        %1628 = vmatpush2.bf16.msra.mxu0 0
        %1629 = vmatprep.subr.bf16.mxu0 0
        %1630 = vmatpush2.bf16.msra.mxu0 0
        %1631 = vmatprep.subr.bf16.mxu0 0
        %1632 = vmatpush2.bf16.msra.mxu0 0
        %1633 = vmatprep.subr.bf16.mxu0 0
        %1634 = vmatpush2.bf16.msra.mxu0 0
        %1635 = vmatprep.subr.bf16.mxu0 0
        %1636 = vmatpush2.bf16.msra.mxu0 0
        %1637 = vmatprep.subr.bf16.mxu0 0
        %1638 = vmatpush2.bf16.msra.mxu0 0
        %1639 = vmatprep.mubr.bf16.mxu0 0
        %1640 = vmatmul.mubr.bf16.gmra.mxu0 %v1605
        %v1641 = vpop.f32.mrf.mxu0
        %v1642 = vadd.f32 %v1590, %v1641
        %v1643 = vpop.f32.mrf.mxu0
        %v1644 = vpop.f32.mrf.mxu0
        %v1645 = vpop.f32.mrf.mxu0
        %1646 = vdwg.mxu0
        %v1647 = vmax.f32 %v1642, 0.0
        %v1648 = vpack.c.bf16 %v1647, %v1647
        %v1649 = vld [vmem:[%s14] sm:$0xf]
        %v1650 = vld [vmem:[%s14 + $0x4] sm:$0xf]
        %v1651 = vld [vmem:[%s14 + $0x8] sm:$0xf]
        %v1652 = vld [vmem:[%s14 + $0xc] sm:$0xf]
        %v1653 = vld [vmem:[%s14 + $0x10] sm:$0xf]
        %v1654 = vld [vmem:[%s14 + $0x14] sm:$0xf]
        %v1655 = vld [vmem:[%s14 + $0x18] sm:$0xf]
        %v1656 = vld [vmem:[%s14 + $0x1c] sm:$0xf]
        %v1657 = vld [vmem:[%s15] sm:$0x1]
        %v1659 = vlaneseq
        %v1660 = vshrl.u32 %v1659, 7
        %v1661 = vsub.s32 0, %v1660
        %v1662 = vrot.slane %v1657, %v1661
        %v1672 = vunpack.c.l.b16 %v1649
        %v1673 = vunpack.c.l.b16 %v1650
        %v1674 = vunpack.c.l.b16 %v1651
        %v1675 = vunpack.c.l.b16 %v1652
        %v1676 = vunpack.c.l.b16 %v1653
        %v1677 = vunpack.c.l.b16 %v1654
        %v1678 = vunpack.c.l.b16 %v1655
        %v1679 = vunpack.c.l.b16 %v1656
        %v1680 = vpack.c.b16 %v1673, %v1672
        %v1681 = vpack.c.b16 %v1675, %v1674
        %v1682 = vpack.c.b16 %v1677, %v1676
        %v1683 = vpack.c.b16 %v1679, %v1678
        %vm1688 = vcmask 523264
        %v1690 = vsel %vm1688, %v1648, 0
        %1692 = vmatprep.subr.bf16.mxu0 0
        %1693 = vmatpush1.bf16.msra.mxu0 0
        %1694 = vmatprep.subr.bf16.mxu0 0
        %1695 = vmatpush1.bf16.msra.mxu0 0
        %1696 = vmatprep.subr.bf16.mxu0 0
        %1697 = vmatpush1.bf16.msra.mxu0 0
        %1698 = vmatprep.subr.bf16.mxu0 0
        %1699 = vmatpush1.bf16.msra.mxu0 0
        %1700 = vmatprep.subr.bf16.mxu0 0
        %1701 = vmatpush1.bf16.msra.mxu0 %v1683
        %1702 = vmatprep.subr.bf16.mxu0 0
        %1703 = vmatpush1.bf16.msra.mxu0 %v1682
        %1704 = vmatprep.subr.bf16.mxu0 0
        %1705 = vmatpush1.bf16.msra.mxu0 %v1681
        %1706 = vmatprep.subr.bf16.mxu0 0
        %1707 = vmatpush1.bf16.msra.mxu0 %v1680
        %1708 = vmatprep.subr.bf16.mxu0 0
        %1709 = vmatpush2.bf16.msra.mxu0 0
        %1710 = vmatprep.subr.bf16.mxu0 0
        %1711 = vmatpush2.bf16.msra.mxu0 0
        %1712 = vmatprep.subr.bf16.mxu0 0
        %1713 = vmatpush2.bf16.msra.mxu0 0
        %1714 = vmatprep.subr.bf16.mxu0 0
        %1715 = vmatpush2.bf16.msra.mxu0 0
        %1716 = vmatprep.subr.bf16.mxu0 0
        %1717 = vmatpush2.bf16.msra.mxu0 0
        %1718 = vmatprep.subr.bf16.mxu0 0
        %1719 = vmatpush2.bf16.msra.mxu0 0
        %1720 = vmatprep.subr.bf16.mxu0 0
        %1721 = vmatpush2.bf16.msra.mxu0 0
        %1722 = vmatprep.subr.bf16.mxu0 0
        %1723 = vmatpush2.bf16.msra.mxu0 0
        %1724 = vmatprep.mubr.bf16.mxu0 0
        %1725 = vmatmul.mubr.bf16.gmra.mxu0 %v1690
        %v1726 = vpop.f32.mrf.mxu0
        %v1727 = vadd.f32 %v1662, %v1726
        %v1728 = vpop.f32.mrf.mxu0
        %v1729 = vpop.f32.mrf.mxu0
        %v1730 = vpop.f32.mrf.mxu0
        %1731 = vdwg.mxu0
        %v1732 = vadd.f32 %v1727, %v1579
        %v1733 = vld [vmem:[%s16] sm:$0x1]
        %v1734 = vld [vmem:[%s17] sm:$0x1]
        %v1735 = vsel %vm913, %v1732, 0.0
        %1736 = vadd.xlane.f32.xlu0 %v1735
        %v1737 = vpop.xlane.xlu0 %1736
        %v1738 = vmul.f32 %v1737, %v1555
        %v1739 = vsub.f32 %v1732, %v1738
        %v1740 = vmul.f32 %v1739, %v1739
        %v1741 = vsel %vm913, %v1740, 0.0
        %1742 = vadd.xlane.f32.xlu0 %v1741
        %v1743 = vpop.xlane.xlu0 %1742
        %v1744 = vmul.f32 %v1743, %v1555
        %v1745 = vadd.f32 %v1744, 1e-06
        %v1746 = vrsqrt.pop %v1745
        %v1747 = vmul.f32 %v1739, %v1746
        %v1749 = vlaneseq
        %v1750 = vshrl.u32 %v1749, 7
        %v1751 = vsub.s32 0, %v1750
        %v1752 = vrot.slane %v1733, %v1751
        %v1754 = vmul.f32 %v1747, %v1752
        %v1756 = vlaneseq
        %v1757 = vshrl.u32 %v1756, 7
        %v1758 = vsub.s32 0, %v1757
        %v1759 = vrot.slane %v1734, %v1758
        %v1761 = vadd.f32 %v1754, %v1759
        %1762 = vst.msk [vmem:[%s714] sm:$0xff] %vm913, %v1761
        %s1763 = sand.u32 %s454, 1
        %s1764 = scalar_lea.sflag [#allocation7], %s1763
        %s1765 = sand.u32 %s454, 1
        %s1766 = smul.addr %s1765, 8
        %s1767 = scalar_lea.vmem [#allocation14], %s1766
        %s1768 = sand.u32 %s482, 1
        %s1769 = scalar_lea.sflag [#allocation16], %s1768
        %s1770 = sand.u32 %s482, 1
        %s1771 = smul.addr %s1770, 16
        %s1772 = scalar_lea.vmem [#allocation15], %s1771
        // Predicated region
        $region117: #{tpu_custom_call.1} parent=91 // pred_check
          %p1773 = pneg %p464
        $region118: #{tpu_custom_call.1} parent=91 // pred_check_branch
          %1775 = sbr.rel (%p1773) target = $region120
        $region119: #{tpu_custom_call.1} parent=91 // pred_region
          %s1777 = ssub.s32 128, 128
          %1778 = vsyncadd %s1764, %s1777
          %s1779 = smul.addr %s46, 2
          %s1780 = sadd.s32 %s47, %s1779
          %s1781 = smul.addr %s1780, 128
          %s1782 = scalar_lea.hbm %s18, %s1781
          %s1784 = sshll.u32 %s1767, 4
          %s1785 = int_to_ptr.vmem [resolvable:$true] %s1784
          %1787 = dma.vmem_to_hbm [thread:$0]  %s1785, 128, %s1782, %s1764
        $region120: #{tpu_custom_call.1} parent=91 // pred_fallthru
          _
        // Predicated region
        $region121: #{tpu_custom_call.1} parent=91 // pred_check
          %p1788 = pneg %p492
        $region122: #{tpu_custom_call.1} parent=91 // pred_check_branch
          %1790 = sbr.rel (%p1788) target = $region124
        $region123: #{tpu_custom_call.1} parent=91 // pred_region
          %s1792 = ssub.s32 256, 256
          %1793 = vsyncadd %s1769, %s1792
          %s1794 = smul.addr %s46, 8
          %s1795 = sadd.s32 %s47, %s1794
          %s1796 = smul.addr %s1795, 64
          %s1797 = scalar_lea.hbm %s19, %s1796
          %s1798 = sshll.u32 %s1772, 4
          %s1799 = int_to_ptr.vmem [resolvable:$true] %s1798
          %1804 = dma.vmem_to_hbm [thread:$0]  %s1799, 256, %s1797, %s1769, 64, 128, 4
        $region124: #{tpu_custom_call.1} parent=91 // pred_fallthru
          _
      $region92: #{tpu_custom_call.1} parent=5 // pred_fallthru
        _
      %p1805 = scmp.le.s32.totalorder 2, %s37
      // Predicated region
      $region125: #{tpu_custom_call.1} parent=5 // pred_check
        %p1806 = pneg %p1805
      $region126: #{tpu_custom_call.1} parent=5 // pred_check_branch
        %1808 = sbr.rel (%p1806) target = $region128
      $region127: #{tpu_custom_call.1} parent=5 // pred_region
        %s1809 = ssub.s32 %s37, 2
        // Predicated region
        $region129: #{tpu_custom_call.1} parent=127 // pred_check
          %p1810 = pneg %p470
        $region130: #{tpu_custom_call.1} parent=127 // pred_check_branch
          %1812 = sbr.rel (%p1810) target = $region132
        $region131: #{tpu_custom_call.1} parent=127 // pred_region
          %s1813 = sand.u32 %s455, 1
          %s1814 = scalar_lea.sflag [#allocation7], %s1813
          %s1815 = sand.u32 %s455, 1
          %s1816 = smul.addr %s1815, 8
          %s1817 = scalar_lea.vmem [#allocation14], %s1816
          %1818 = dma.done %s1814, 128
        $region132: #{tpu_custom_call.1} parent=127 // pred_fallthru
          _
        // Predicated region
        $region133: #{tpu_custom_call.1} parent=127 // pred_check
          %p1819 = pneg %p498
        $region134: #{tpu_custom_call.1} parent=127 // pred_check_branch
          %1821 = sbr.rel (%p1819) target = $region136
        $region135: #{tpu_custom_call.1} parent=127 // pred_region
          %s1822 = sand.u32 %s483, 1
          %s1823 = scalar_lea.sflag [#allocation16], %s1822
          %s1824 = sand.u32 %s483, 1
          %s1825 = smul.addr %s1824, 16
          %s1826 = scalar_lea.vmem [#allocation15], %s1825
          %1827 = dma.done %s1823, 256
        $region136: #{tpu_custom_call.1} parent=127 // pred_fallthru
          _
      $region128: #{tpu_custom_call.1} parent=5 // pred_fallthru
        _
    $region6: #{tpu_custom_call.1} parent=1 // loop_footer
      %s41 = sadd.s32 1, %s37
    $region7: #{tpu_custom_call.1} parent=1 // loop_footer_branch
      %36 = sbr.rel target = $region3
    $region8: #{tpu_custom_call.1} parent=1 // loop_exit
      _
    %1828 = vsyncpa [#allocation6], 1
    %s1829 = scalar_lea.sflag [#allocation6], 1
    %1830 = vsyncpa %s1829, 1
    %1831 = vsyncpa [#allocation9], 1
    %1832 = vsyncpa [#allocation12], 1
    %1833 = vsyncpa [#allocation7], 1
    %s1834 = scalar_lea.sflag [#allocation7], 1
    %1835 = vsyncpa %s1834, 1
    %1836 = vsyncpa [#allocation16], 1
    %s1837 = scalar_lea.sflag [#allocation16], 1
    %1838 = vsyncpa %s1837, 1

</llo_original>
